<compile_context>
chip_gen: v6e
topology: v6e:2x2x1
jax: 0.10.0
libtpu: 0.0.40
codegen_flags: <defaults>
</compile_context>

<pallas_src>
import jax
import jax.numpy as jnp
from jax.experimental import pallas as pl
from jax.experimental.pallas import tpu as pltpu

INPUT_SIZE = 784
HIDDEN_SIZE = 500
NUM_CLASSES = 10

HIDDEN_PAD = 512    # 4 * 128  (lane-clean hidden / clean K for second matmul)
CLASSES_PAD = 128   # 1 * 128  (lane-dense output stores; sliced back to 10)

MAX_TB = 1024       # batch-tile cap; ~11 MiB working set incl. double buffers


def _round_up(n, m):
    return pl.cdiv(n, m) * m


def ffnn_kernel(x_ref, w1_ref, b1_ref, w2_ref, b2_ref, out_ref):
    # In-kernel cast (VPU, hidden under the MXU) -- no wrapper pass over x.
    x = x_ref[...].astype(jnp.bfloat16)
    # fc1: [TB, 784](bf16) @ [784, 512](bf16) -> f32 accumulate, + bias, ReLU.
    h = jnp.dot(x, w1_ref[...], preferred_element_type=jnp.float32)
    h = jnp.maximum(h + b1_ref[...], 0.0)
    # fc2: [TB, 512](bf16) @ [512, 128](bf16) -> f32 accumulate, + bias.
    o = jnp.dot(h.astype(jnp.bfloat16), w2_ref[...],
                preferred_element_type=jnp.float32)
    out_ref[...] = (o + b2_ref[...]).astype(out_ref.dtype)


@jax.jit
def ffnn_forward(x, w1, b1, w2, b2):
    """x: [B, INPUT_SIZE] float32 (or bfloat16).  Returns [B, NUM_CLASSES] f32.

    w1: [INPUT_SIZE, HIDDEN_PAD] bf16, b1: [1, HIDDEN_PAD] f32,
    w2: [HIDDEN_PAD, CLASSES_PAD] bf16, b2: [1, CLASSES_PAD] f32 (zero-padded).
    """
    B = x.shape[0]

    # --- Batch-tile selection -------------------------------------------
    # Tiles of at most MAX_TB rows, rounded to a multiple of 16; force at
    # least 2 grid steps when B >= 32 so the "parallel" axis can occupy both
    # TensorCores on v7x.
    b16 = _round_up(B, 16)
    n_tiles = pl.cdiv(b16, MAX_TB)
    if b16 >= 32:
        n_tiles = max(n_tiles, 2)
    TB = _round_up(pl.cdiv(b16, n_tiles), 16)
    B_pad = _round_up(B, TB)

    # Pad the batch only when it does not already divide into TB tiles.
    # TODO(synk): for ragged production batches, push this pad upstream or
    # rely on Pallas edge-block masking to avoid the extra HBM pass.
    if B_pad != B:
        x = jnp.pad(x, ((0, B_pad - B), (0, 0)))

    grid = (B_pad // TB,)
    out = pl.pallas_call(
        ffnn_kernel,
        out_shape=jax.ShapeDtypeStruct((B_pad, CLASSES_PAD), jnp.bfloat16),
        grid=grid,
        in_specs=[
            # x tile marches over the batch (double-buffered by Pallas);
            # weights/biases pinned at block 0 -> fetched once, VMEM-resident.
            pl.BlockSpec((TB, INPUT_SIZE), lambda i: (i, 0)),
            pl.BlockSpec((INPUT_SIZE, HIDDEN_PAD), lambda i: (0, 0)),
            pl.BlockSpec((1, HIDDEN_PAD), lambda i: (0, 0)),
            pl.BlockSpec((HIDDEN_PAD, CLASSES_PAD), lambda i: (0, 0)),
            pl.BlockSpec((1, CLASSES_PAD), lambda i: (0, 0)),
        ],
        out_specs=pl.BlockSpec((TB, CLASSES_PAD), lambda i: (i, 0)),
        compiler_params=pltpu.CompilerParams(
            dimension_semantics=("parallel",),
            vmem_limit_bytes=32 * 1024 * 1024),  # v5e default is only 16 MiB
    )(x, w1, b1, w2, b2)

    # Tiny epilogue: drop batch/class padding, return f32 like nn.Linear.
    return out[:B, :NUM_CLASSES].astype(jnp.float32)


def init_params(key):
    """PyTorch-style U(-1/sqrt(fan_in), +) init, stored as [in, out]."""
    k1, k2, k3, k4 = jax.random.split(key, 4)
    bound1 = 1.0 / jnp.sqrt(INPUT_SIZE)
    bound2 = 1.0 / jnp.sqrt(HIDDEN_SIZE)
    w1 = jax.random.uniform(k1, (INPUT_SIZE, HIDDEN_SIZE), jnp.float32,
                            -bound1, bound1)
    b1 = jax.random.uniform(k2, (1, HIDDEN_SIZE), jnp.float32, -bound1, bound1)
    w2 = jax.random.uniform(k3, (HIDDEN_SIZE, NUM_CLASSES), jnp.float32,
                            -bound2, bound2)
    b2 = jax.random.uniform(k4, (1, NUM_CLASSES), jnp.float32, -bound2, bound2)
    return w1, b1, w2, b2


def pad_params(w1, b1, w2, b2):
    """Zero-pad to lane-clean shapes and cast weights to bf16 (exact padding)."""
    w1p = jnp.pad(w1, ((0, 0), (0, HIDDEN_PAD - HIDDEN_SIZE)))
    b1p = jnp.pad(b1, ((0, 0), (0, HIDDEN_PAD - HIDDEN_SIZE)))
    w2p = jnp.pad(w2, ((0, HIDDEN_PAD - HIDDEN_SIZE),
                       (0, CLASSES_PAD - NUM_CLASSES)))
    b2p = jnp.pad(b2, ((0, 0), (0, CLASSES_PAD - NUM_CLASSES)))
    return (w1p.astype(jnp.bfloat16), b1p.astype(jnp.float32),
            w2p.astype(jnp.bfloat16), b2p.astype(jnp.float32))


if __name__ == "__main__":
    key = jax.random.PRNGKey(0)
    kx, kp = jax.random.split(key)

    batch = 64
    x = jax.random.normal(kx, (batch, INPUT_SIZE), jnp.float32)
    w1, b1, w2, b2 = init_params(kp)
    w1p, b1p, w2p, b2p = pad_params(w1, b1, w2, b2)

    out = ffnn_forward(x, w1p, b1p, w2p, b2p)
    out = jax.block_until_ready(out)

    # Reference in plain JAX, mimicking the kernel's bf16-operand /
    # f32-accumulate numerics (padding is exact, so unpadded shapes suffice).
    x_bf = x.astype(jnp.bfloat16).astype(jnp.float32)
    w1_bf = w1.astype(jnp.bfloat16).astype(jnp.float32)
    w2_bf = w2.astype(jnp.bfloat16).astype(jnp.float32)
    h_ref = jnp.maximum(x_bf @ w1_bf + b1, 0.0)
    h_ref = h_ref.astype(jnp.bfloat16).astype(jnp.float32)
    ref = h_ref @ w2_bf + b2

    assert out.shape == (batch, NUM_CLASSES)
    assert jnp.allclose(out, ref, atol=2e-2, rtol=2e-2)

    print("KERNEL_OK")
</pallas_src>

<mosaic_0001>
module attributes {stable_mosaic.version = 11 : i64} {
  func.func @ffnn_kernel(%arg0: i32, %arg1: memref<32x784xf32, #tpu.memory_space<vmem>>, %arg2: memref<784x512xbf16, #tpu.memory_space<vmem>>, %arg3: memref<1x512xf32, #tpu.memory_space<vmem>>, %arg4: memref<512x128xbf16, #tpu.memory_space<vmem>>, %arg5: memref<1x128xf32, #tpu.memory_space<vmem>>, %arg6: memref<32x128xbf16, #tpu.memory_space<vmem>>) attributes {dimension_semantics = [#tpu.dimension_semantics<parallel>], iteration_bounds = array<i64: 2>, scalar_prefetch = 0 : i64, scratch_operands = 0 : i64, tpu.core_type = #tpu.core_type<tc>, window_params = [{transform_indices = @transform_0, window_bounds = array<i64: 32, 784>}, {pipeline_mode = #tpu.pipeline_mode<synchronous>, transform_indices = @transform_1, window_bounds = array<i64: 784, 512>}, {pipeline_mode = #tpu.pipeline_mode<synchronous>, transform_indices = @transform_2, window_bounds = array<i64: 1, 512>}, {pipeline_mode = #tpu.pipeline_mode<synchronous>, transform_indices = @transform_3, window_bounds = array<i64: 512, 128>}, {pipeline_mode = #tpu.pipeline_mode<synchronous>, transform_indices = @transform_4, window_bounds = array<i64: 1, 128>}, {transform_indices = @transform_5, window_bounds = array<i64: 32, 128>}]} {
    %c0 = arith.constant 0 : index
    %c0_0 = arith.constant 0 : index
    %0 = vector.load %arg1[%c0, %c0_0] : memref<32x784xf32, #tpu.memory_space<vmem>>, vector<32x784xf32>
    %1 = arith.truncf %0 : vector<32x784xf32> to vector<32x784xbf16>
    %c0_1 = arith.constant 0 : index
    %c0_2 = arith.constant 0 : index
    %2 = vector.load %arg2[%c0_1, %c0_2] : memref<784x512xbf16, #tpu.memory_space<vmem>>, vector<784x512xbf16>
    %cst = arith.constant dense<0.000000e+00> : vector<32x512xf32>
    %3 = tpu.matmul %1, %2, %cst {dimension_numbers = #tpu.dot_dimension_numbers<[1], [0], [0], [1], [0, 0, 1, 1], [], []>} : vector<32x784xbf16>, vector<784x512xbf16>, vector<32x512xf32> -> vector<32x512xf32>
    %c0_3 = arith.constant 0 : index
    %c0_4 = arith.constant 0 : index
    %4 = vector.load %arg3[%c0_3, %c0_4] : memref<1x512xf32, #tpu.memory_space<vmem>>, vector<1x512xf32>
    %5 = vector.broadcast %4 : vector<1x512xf32> to vector<32x512xf32>
    %6 = arith.addf %3, %5 : vector<32x512xf32>
    %cst_5 = arith.constant 0.000000e+00 : f32
    %7 = vector.broadcast %cst_5 : f32 to vector<32x512xf32>
    %8 = arith.maximumf %6, %7 : vector<32x512xf32>
    %9 = arith.truncf %8 : vector<32x512xf32> to vector<32x512xbf16>
    %c0_6 = arith.constant 0 : index
    %c0_7 = arith.constant 0 : index
    %10 = vector.load %arg4[%c0_6, %c0_7] : memref<512x128xbf16, #tpu.memory_space<vmem>>, vector<512x128xbf16>
    %cst_8 = arith.constant dense<0.000000e+00> : vector<32x128xf32>
    %11 = tpu.matmul %9, %10, %cst_8 {dimension_numbers = #tpu.dot_dimension_numbers<[1], [0], [0], [1], [0, 0, 1, 1], [], []>} : vector<32x512xbf16>, vector<512x128xbf16>, vector<32x128xf32> -> vector<32x128xf32>
    %c0_9 = arith.constant 0 : index
    %c0_10 = arith.constant 0 : index
    %12 = vector.load %arg5[%c0_9, %c0_10] : memref<1x128xf32, #tpu.memory_space<vmem>>, vector<1x128xf32>
    %13 = vector.broadcast %12 : vector<1x128xf32> to vector<32x128xf32>
    %14 = arith.addf %11, %13 : vector<32x128xf32>
    %15 = arith.truncf %14 : vector<32x128xf32> to vector<32x128xbf16>
    %c0_11 = arith.constant 0 : index
    %c0_12 = arith.constant 0 : index
    %16 = vector.load %arg6[%c0_11, %c0_12] : memref<32x128xbf16, #tpu.memory_space<vmem>>, vector<32x128xbf16>
    tpu.vector_store %arg6[%c0_11, %c0_12], %15 {strides = array<i32>} : memref<32x128xbf16, #tpu.memory_space<vmem>>, vector<32x128xbf16>,
    return
  }
  func.func @transform_0(%arg0: i32) -> (i32, i32) {
    %c0_i32 = arith.constant 0 : i32
    %c0_i32_0 = arith.constant 0 : i32
    return %arg0, %c0_i32 : i32, i32
  }
  func.func @transform_1(%arg0: i32) -> (i32, i32) {
    %c0_i32 = arith.constant 0 : i32
    %c0_i32_0 = arith.constant 0 : i32
    %c0_i32_1 = arith.constant 0 : i32
    return %c0_i32, %c0_i32_0 : i32, i32
  }
  func.func @transform_2(%arg0: i32) -> (i32, i32) {
    %c0_i32 = arith.constant 0 : i32
    %c0_i32_0 = arith.constant 0 : i32
    %c0_i32_1 = arith.constant 0 : i32
    return %c0_i32, %c0_i32_0 : i32, i32
  }
  func.func @transform_3(%arg0: i32) -> (i32, i32) {
    %c0_i32 = arith.constant 0 : i32
    %c0_i32_0 = arith.constant 0 : i32
    %c0_i32_1 = arith.constant 0 : i32
    return %c0_i32, %c0_i32_0 : i32, i32
  }
  func.func @transform_4(%arg0: i32) -> (i32, i32) {
    %c0_i32 = arith.constant 0 : i32
    %c0_i32_0 = arith.constant 0 : i32
    %c0_i32_1 = arith.constant 0 : i32
    return %c0_i32, %c0_i32_0 : i32, i32
  }
  func.func @transform_5(%arg0: i32) -> (i32, i32) {
    %c0_i32 = arith.constant 0 : i32
    %c0_i32_0 = arith.constant 0 : i32
    return %arg0, %c0_i32 : i32, i32
  }
}

</mosaic_0001>

<llo_original>
// kernel: ffnn_forward.1
$region0: #{ffnn_forward.1}
  #allocation0 [shape = 'u32[]', space=smem, size = 0x4, offset = 0x4, fixed_abs, tag = 'smem constant byte address 0x4 - core index']
  #allocation1 [shape = 'u32[144,128]{1,0:T(1,128)}', space=vmem, size = 0x12000, scoped, tag = 'internal scratch']
  %s0 = inlined_call_operand.hbm [shape: f32[64,784], index: 0, kind: input, shape index: {}]
  %s1 = inlined_call_operand.hbm [shape: bf16[784,512], index: 1, kind: input, shape index: {}]
  %s2 = inlined_call_operand.hbm [shape: f32[1,512], index: 2, kind: input, shape index: {}]
  %s3 = inlined_call_operand.hbm [shape: bf16[512,128], index: 3, kind: input, shape index: {}]
  %s4 = inlined_call_operand.vmem [shape: f32[1,128], index: 4, kind: input, shape index: {}]
  %s5 = inlined_call_operand.vmem [shape: bf16[64,128], index: 5, kind: output, shape index: {}]
  %s6 = sld [smem:[#allocation0]]
  $region69: #{ffnn_forward.1} parent=0
    _
  %s8 = ssub.s32 1, %s6
  %s9 = scalar_select 0, %s8, %s6
  $region1: #{ffnn_forward.1} parent=0
    #allocation2 [shape = 'u8[229376]{0}', space=vmem, size = 0x38000, scoped, tag = 'input window, operand 0']
    #allocation3 [shape = 's32[2]{0}', space=sflag, size = 0x8, scoped, tag = 'scoped memory for ffnn_forward.1']
    #allocation4 [shape = 'u8[802816]{0}', space=vmem, size = 0xc4000, scoped, tag = 'input window, operand 1, single buffered']
    #allocation5 [shape = 's32[1]{0}', space=sflag, size = 0x4, scoped, tag = 'scoped memory for ffnn_forward.1']
    #allocation6 [shape = 'u8[2048]{0}', space=vmem, size = 0x800, scoped, tag = 'input window, operand 2, single buffered']
    #allocation7 [shape = 'u8[131072]{0}', space=vmem, size = 0x20000, scoped, tag = 'input window, operand 3, single buffered']
    #allocation8 [shape = 's32[1]{0}', space=sflag, size = 0x4, scoped, tag = 'scoped memory for ffnn_forward.1']
    %10 = vsyncpa [#allocation3], 0
    %s11 = scalar_lea.sflag [#allocation3], 1
    %12 = vsyncpa %s11, 0
    %13 = vsyncpa [#allocation5], 0
    %14 = vsyncpa [#allocation8], 0
    loop: start=0, step=1, limit=4
    $region2: #{ffnn_forward.1} parent=1 // loop_pre_header
      _
    $region3: #{ffnn_forward.1} parent=1 // loop_header
      %s16 = sphi 0, %s20
      %p17 = scmp.ge.s32.totalorder %s16, 4
      %s26 = sphi 0, %s28
      %s29 = sphi 0, %s26
      %s30 = sphi 0, %s29
      %s46 = sphi 0, %s30
      %s50 = sphi 0, %s50
      %s52 = sphi 0, %s50
      %s53 = sphi 0, %s52
      %s67 = sphi 0, %s53
      %s71 = sphi 0, %s71
      %s73 = sphi 0, %s71
      %s74 = sphi 0, %s73
      %s88 = sphi 0, %s74
      %s92 = sphi 0, %s92
      %s94 = sphi 0, %s92
      %s95 = sphi 0, %s94
      %s109 = sphi 0, %s95
      %s113 = sphi 0, %s113
      %s115 = sphi 0, %s113
      %s116 = sphi 0, %s115
      %s130 = sphi 0, %s116
      %s136 = sphi 0, %s138
      %s139 = sphi 0, %s136
      %s140 = sphi 0, %s139
      %s156 = sphi 0, %s140
    $region4: #{ffnn_forward.1} parent=1 // loop_header_branch
      %19 = sbr.rel (%p17) target = $region8
    $region5: #{ffnn_forward.1} parent=1 // loop_body
      %s21 = ssub.s32 %s16, 1
      %s22 = ssub.s32 %s16, 2
      %s23 = sadd.s32 %s16, 1
      %s24 = ssub.s32 %s16, %s23
      %p25 = scmp.eq.s32.totalorder %s24, 0
      %s27 = sadd.s32 %s26, 1
      %s28 = scalar_select %p25, %s26, %s27
      %p31 = pneg %p25
      %p32 = scmp.eq.s32.totalorder %s16, 1
      %p33 = por %p31, %p32
      %p34 = scmp.ne.s32.totalorder %s26, %s29
      %p35 = scmp.eq.s32.totalorder %s16, 0
      %p36 = por %p34, %p35
      %p37 = scmp.ne.s32.totalorder %s26, %s29
      %p38 = scmp.eq.s32.totalorder %s21, 1
      %p39 = por %p37, %p38
      %p40 = scmp.ne.s32.totalorder %s29, %s30
      %p41 = scmp.eq.s32.totalorder %s21, 0
      %p42 = por %p40, %p41
      %p43 = scmp.ne.s32.totalorder %s29, %s30
      %p44 = scmp.eq.s32.totalorder %s22, 1
      %p45 = por %p43, %p44
      %p47 = scmp.ne.s32.totalorder %s30, %s46
      %p48 = scmp.eq.s32.totalorder %s22, 0
      %p49 = por %p47, %p48
      %s51 = sadd.s32 %s50, 1
      %p54 = scmp.eq.s32.totalorder %s16, 1
      %p55 = scmp.ne.s32.totalorder %s50, %s52
      %p56 = scmp.eq.s32.totalorder %s16, 0
      %p57 = por %p55, %p56
      %p58 = scmp.ne.s32.totalorder %s50, %s52
      %p59 = scmp.eq.s32.totalorder %s21, 1
      %p60 = por %p58, %p59
      %p61 = scmp.ne.s32.totalorder %s52, %s53
      %p62 = scmp.eq.s32.totalorder %s21, 0
      %p63 = por %p61, %p62
      %p64 = scmp.ne.s32.totalorder %s52, %s53
      %p65 = scmp.eq.s32.totalorder %s22, 1
      %p66 = por %p64, %p65
      %p68 = scmp.ne.s32.totalorder %s53, %s67
      %p69 = scmp.eq.s32.totalorder %s22, 0
      %p70 = por %p68, %p69
      %s72 = sadd.s32 %s71, 1
      %p75 = scmp.eq.s32.totalorder %s16, 1
      %p76 = scmp.ne.s32.totalorder %s71, %s73
      %p77 = scmp.eq.s32.totalorder %s16, 0
      %p78 = por %p76, %p77
      %p79 = scmp.ne.s32.totalorder %s71, %s73
      %p80 = scmp.eq.s32.totalorder %s21, 1
      %p81 = por %p79, %p80
      %p82 = scmp.ne.s32.totalorder %s73, %s74
      %p83 = scmp.eq.s32.totalorder %s21, 0
      %p84 = por %p82, %p83
      %p85 = scmp.ne.s32.totalorder %s73, %s74
      %p86 = scmp.eq.s32.totalorder %s22, 1
      %p87 = por %p85, %p86
      %p89 = scmp.ne.s32.totalorder %s74, %s88
      %p90 = scmp.eq.s32.totalorder %s22, 0
      %p91 = por %p89, %p90
      %s93 = sadd.s32 %s92, 1
      %p96 = scmp.eq.s32.totalorder %s16, 1
      %p97 = scmp.ne.s32.totalorder %s92, %s94
      %p98 = scmp.eq.s32.totalorder %s16, 0
      %p99 = por %p97, %p98
      %p100 = scmp.ne.s32.totalorder %s92, %s94
      %p101 = scmp.eq.s32.totalorder %s21, 1
      %p102 = por %p100, %p101
      %p103 = scmp.ne.s32.totalorder %s94, %s95
      %p104 = scmp.eq.s32.totalorder %s21, 0
      %p105 = por %p103, %p104
      %p106 = scmp.ne.s32.totalorder %s94, %s95
      %p107 = scmp.eq.s32.totalorder %s22, 1
      %p108 = por %p106, %p107
      %p110 = scmp.ne.s32.totalorder %s95, %s109
      %p111 = scmp.eq.s32.totalorder %s22, 0
      %p112 = por %p110, %p111
      %s114 = sadd.s32 %s113, 1
      %p117 = scmp.eq.s32.totalorder %s16, 1
      %p118 = scmp.ne.s32.totalorder %s113, %s115
      %p119 = scmp.eq.s32.totalorder %s16, 0
      %p120 = por %p118, %p119
      %p121 = scmp.ne.s32.totalorder %s113, %s115
      %p122 = scmp.eq.s32.totalorder %s21, 1
      %p123 = por %p121, %p122
      %p124 = scmp.ne.s32.totalorder %s115, %s116
      %p125 = scmp.eq.s32.totalorder %s21, 0
      %p126 = por %p124, %p125
      %p127 = scmp.ne.s32.totalorder %s115, %s116
      %p128 = scmp.eq.s32.totalorder %s22, 1
      %p129 = por %p127, %p128
      %p131 = scmp.ne.s32.totalorder %s116, %s130
      %p132 = scmp.eq.s32.totalorder %s22, 0
      %p133 = por %p131, %p132
      %s134 = ssub.s32 %s16, %s23
      %p135 = scmp.eq.s32.totalorder %s134, 0
      %s137 = sadd.s32 %s136, 1
      %s138 = scalar_select %p135, %s136, %s137
      %p141 = pneg %p135
      %p142 = scmp.eq.s32.totalorder %s16, 1
      %p143 = por %p141, %p142
      %p144 = scmp.ne.s32.totalorder %s136, %s139
      %p145 = scmp.eq.s32.totalorder %s16, 0
      %p146 = por %p144, %p145
      %p147 = scmp.ne.s32.totalorder %s136, %s139
      %p148 = scmp.eq.s32.totalorder %s21, 1
      %p149 = por %p147, %p148
      %p150 = scmp.ne.s32.totalorder %s139, %s140
      %p151 = scmp.eq.s32.totalorder %s21, 0
      %p152 = por %p150, %p151
      %p153 = scmp.ne.s32.totalorder %s139, %s140
      %p154 = scmp.eq.s32.totalorder %s22, 1
      %p155 = por %p153, %p154
      %p157 = scmp.ne.s32.totalorder %s140, %s156
      %p158 = scmp.eq.s32.totalorder %s22, 0
      %p159 = por %p157, %p158
      %p160 = scmp.le.s32.totalorder 1, %s16
      %p161 = scmp.lt.s32.totalorder %s16, 3
      %p162 = pnand %p160, %p161
      %p163 = pneg %p162
      // Predicated region
      $region9: #{ffnn_forward.1} parent=5 // pred_check
        _
      $region10: #{ffnn_forward.1} parent=5 // pred_check_branch
        %165 = sbr.rel (%p162) target = $region12
      $region11: #{ffnn_forward.1} parent=5 // pred_region
        %s166 = ssub.s32 %s16, 1
        // Predicated region
        $region13: #{ffnn_forward.1} parent=11 // pred_check
          %p167 = pneg %p63
        $region14: #{ffnn_forward.1} parent=11 // pred_check_branch
          %169 = sbr.rel (%p167) target = $region16
        $region15: #{ffnn_forward.1} parent=11 // pred_region
          %s171 = ssub.s32 25088, 25088
          %172 = vsyncadd [#allocation5], %s171
          %s173 = sshll.u32 [#allocation4], 4
          %s174 = int_to_ptr.vmem [resolvable:$true] %s173
          %179 = dma.hbm_to_vmem [thread:$0]  %s1, 25088, %s174, [#allocation5], 256, 256, 16
        $region16: #{ffnn_forward.1} parent=11 // pred_fallthru
          _
        // Predicated region
        $region17: #{ffnn_forward.1} parent=11 // pred_check
          %p180 = pneg %p84
        $region18: #{ffnn_forward.1} parent=11 // pred_check_branch
          %182 = sbr.rel (%p180) target = $region20
        $region19: #{ffnn_forward.1} parent=11 // pred_region
          %s184 = ssub.s32 64, 64
          %185 = vsyncadd [#allocation5], %s184
          %s187 = sshll.u32 [#allocation6], 4
          %s188 = int_to_ptr.vmem [resolvable:$true] %s187
          %190 = dma.hbm_to_vmem [thread:$0]  %s2, 64, %s188, [#allocation5]
        $region20: #{ffnn_forward.1} parent=11 // pred_fallthru
          _
        // Predicated region
        $region21: #{ffnn_forward.1} parent=11 // pred_check
          %p191 = pneg %p105
        $region22: #{ffnn_forward.1} parent=11 // pred_check_branch
          %193 = sbr.rel (%p191) target = $region24
        $region23: #{ffnn_forward.1} parent=11 // pred_region
          %s195 = ssub.s32 4096, 4096
          %196 = vsyncadd [#allocation8], %s195
          %s197 = sshll.u32 [#allocation7], 4
          %s198 = int_to_ptr.vmem [resolvable:$true] %s197
          %203 = dma.hbm_to_vmem [thread:$0]  %s3, 4096, %s198, [#allocation8], 64, 64, 4
        $region24: #{ffnn_forward.1} parent=11 // pred_fallthru
          _
        // Predicated region
        $region25: #{ffnn_forward.1} parent=11 // pred_check
          %p204 = pneg %p126
        $region26: #{ffnn_forward.1} parent=11 // pred_check_branch
          %206 = sbr.rel (%p204) target = $region28
        $region27: #{ffnn_forward.1} parent=11 // pred_region
          _
        $region28: #{ffnn_forward.1} parent=11 // pred_fallthru
          _
      $region12: #{ffnn_forward.1} parent=5 // pred_fallthru
        _
      %p207 = scmp.lt.s32.totalorder %s16, 2
      // Predicated region
      $region29: #{ffnn_forward.1} parent=5 // pred_check
        %p208 = pneg %p207
      $region30: #{ffnn_forward.1} parent=5 // pred_check_branch
        %210 = sbr.rel (%p208) target = $region32
      $region31: #{ffnn_forward.1} parent=5 // pred_region
        // Predicated region
        $region33: #{ffnn_forward.1} parent=31 // pred_check
          %p211 = pneg %p36
        $region34: #{ffnn_forward.1} parent=31 // pred_check_branch
          %213 = sbr.rel (%p211) target = $region36
        $region35: #{ffnn_forward.1} parent=31 // pred_region
          %s214 = sand.u32 %s26, 1
          %s215 = scalar_lea.sflag [#allocation3], %s214
          %s216 = sand.u32 %s26, 1
          %s217 = smul.addr %s216, 224
          %s218 = scalar_lea.vmem [#allocation2], %s217
          %s219 = smul.u32 4, %s16
          %s221 = ssub.s32 3584, 3584
          %222 = vsyncadd %s215, %s221
          %s223 = smul.addr %s219, 7
          %s224 = smul.addr %s223, 128
          %s225 = scalar_lea.hbm %s0, %s224
          %s226 = sshll.u32 %s218, 4
          %s227 = int_to_ptr.vmem [resolvable:$true] %s226
          %232 = dma.hbm_to_vmem [thread:$0]  %s225, 3584, %s227, %s215, 896, 896, 56
        $region36: #{ffnn_forward.1} parent=31 // pred_fallthru
          _
      $region32: #{ffnn_forward.1} parent=5 // pred_fallthru
        _
      %p233 = scmp.le.s32.totalorder 1, %s16
      %p234 = scmp.lt.s32.totalorder %s16, 3
      %p235 = pnand %p233, %p234
      %p236 = pneg %p235
      // Predicated region
      $region37: #{ffnn_forward.1} parent=5 // pred_check
        _
      $region38: #{ffnn_forward.1} parent=5 // pred_check_branch
        %238 = sbr.rel (%p235) target = $region40
      $region39: #{ffnn_forward.1} parent=5 // pred_region
        %s239 = ssub.s32 %s16, 1
        %s240 = sand.u32 %s29, 1
        %s241 = scalar_lea.sflag [#allocation3], %s240
        %s242 = sand.u32 %s29, 1
        %s243 = smul.addr %s242, 224
        %s244 = scalar_lea.vmem [#allocation2], %s243
        // Predicated region
        $region41: #{ffnn_forward.1} parent=39 // pred_check
          %p245 = pneg %p42
        $region42: #{ffnn_forward.1} parent=39 // pred_check_branch
          %247 = sbr.rel (%p245) target = $region44
        $region43: #{ffnn_forward.1} parent=39 // pred_region
          %248 = dma.done %s241, 3584
        $region44: #{ffnn_forward.1} parent=39 // pred_fallthru
          _
        // Predicated region
        $region45: #{ffnn_forward.1} parent=39 // pred_check
          %p249 = pneg %p63
        $region46: #{ffnn_forward.1} parent=39 // pred_check_branch
          %251 = sbr.rel (%p249) target = $region48
        $region47: #{ffnn_forward.1} parent=39 // pred_region
          %252 = dma.done [#allocation5], 25088
        $region48: #{ffnn_forward.1} parent=39 // pred_fallthru
          _
        // Predicated region
        $region49: #{ffnn_forward.1} parent=39 // pred_check
          %p253 = pneg %p84
        $region50: #{ffnn_forward.1} parent=39 // pred_check_branch
          %255 = sbr.rel (%p253) target = $region52
        $region51: #{ffnn_forward.1} parent=39 // pred_region
          %256 = dma.done [#allocation5], 64
        $region52: #{ffnn_forward.1} parent=39 // pred_fallthru
          _
        // Predicated region
        $region53: #{ffnn_forward.1} parent=39 // pred_check
          %p257 = pneg %p105
        $region54: #{ffnn_forward.1} parent=39 // pred_check_branch
          %259 = sbr.rel (%p257) target = $region56
        $region55: #{ffnn_forward.1} parent=39 // pred_region
          %260 = dma.done [#allocation8], 4096
        $region56: #{ffnn_forward.1} parent=39 // pred_fallthru
          _
        %s261 = sand.u32 %s29, 1
        %s262 = scalar_lea.sflag [#allocation3], %s261
        %s263 = sand.u32 %s29, 1
        %s264 = smul.addr %s263, 224
        %s265 = scalar_lea.vmem [#allocation2], %s264
        %p266 = pneg %p42
        %p267 = pneg %p39
        %p268 = pneg %p63
        %p269 = pneg %p60
        %p270 = pneg %p84
        %p271 = pneg %p81
        %p272 = pneg %p105
        %p273 = pneg %p102
        %p274 = pneg %p126
        %p275 = pneg %p123
        %p276 = pneg %p152
        %p277 = pneg %p149
        %s278 = smul.u32 4, %s21
        %p279 = scmp.lt.s32.totalorder %s278, 7
        %s280 = scalar_select %p279, %s278, 7
        %s281 = smul.addr %s280, 4
        %s282 = scalar_lea.vmem %s5, %s281
        %s283 = smul.u32 4, %s21
        %s284 = smul.u32 4, %s21
        %p285 = scmp.lt.s32.totalorder %s284, 7
        %s286 = scalar_select %p285, %s284, 7
        %s287 = smul.addr %s286, 4
        %s288 = scalar_lea.vmem %s5, %s287
        %s289 = smul.u32 4, %s21
        %v291 = vld [vmem:[%s244] sm:$0xff]
        %v292 = vld [vmem:[%s244 + $0x8] sm:$0xff]
        %v293 = vld [vmem:[%s244 + $0x10] sm:$0xff]
        %v294 = vld [vmem:[%s244 + $0x18] sm:$0xff]
        %v295 = vld [vmem:[%s244 + $0x20] sm:$0xff]
        %v296 = vld [vmem:[%s244 + $0x28] sm:$0xff]
        %v297 = vld [vmem:[%s244 + $0x30] sm:$0xff]
        %v298 = vld [vmem:[%s244 + $0x38] sm:$0xff]
        %v299 = vld [vmem:[%s244 + $0x40] sm:$0xff]
        %v300 = vld [vmem:[%s244 + $0x48] sm:$0xff]
        %v301 = vld [vmem:[%s244 + $0x50] sm:$0xff]
        %v302 = vld [vmem:[%s244 + $0x58] sm:$0xff]
        %v303 = vld [vmem:[%s244 + $0x60] sm:$0xff]
        %v304 = vld [vmem:[%s244 + $0x68] sm:$0xff]
        %v305 = vld [vmem:[%s244 + $0x70] sm:$0xff]
        %v306 = vld [vmem:[%s244 + $0x78] sm:$0xff]
        %v307 = vld [vmem:[%s244 + $0x80] sm:$0xff]
        %v308 = vld [vmem:[%s244 + $0x88] sm:$0xff]
        %v309 = vld [vmem:[%s244 + $0x90] sm:$0xff]
        %v310 = vld [vmem:[%s244 + $0x98] sm:$0xff]
        %v311 = vld [vmem:[%s244 + $0xa0] sm:$0xff]
        %v312 = vld [vmem:[%s244 + $0xa8] sm:$0xff]
        %v313 = vld [vmem:[%s244 + $0xb0] sm:$0xff]
        %v314 = vld [vmem:[%s244 + $0xb8] sm:$0xff]
        %v315 = vld [vmem:[%s244 + $0xc0] sm:$0xff]
        %v316 = vld [vmem:[%s244 + $0xc8] sm:$0xff]
        %v317 = vld [vmem:[%s244 + $0xd0] sm:$0xff]
        %v318 = vld [vmem:[%s244 + $0xd8] sm:$0xff]
        %v319 = vpack.c.bf16 %v298, %v291
        %v320 = vpack.c.bf16 %v299, %v292
        %v321 = vpack.c.bf16 %v300, %v293
        %v322 = vpack.c.bf16 %v301, %v294
        %v323 = vpack.c.bf16 %v302, %v295
        %v324 = vpack.c.bf16 %v303, %v296
        %v325 = vpack.c.bf16 %v304, %v297
        %v326 = vpack.c.bf16 %v312, %v305
        %v327 = vpack.c.bf16 %v313, %v306
        %v328 = vpack.c.bf16 %v314, %v307
        %v329 = vpack.c.bf16 %v315, %v308
        %v330 = vpack.c.bf16 %v316, %v309
        %v331 = vpack.c.bf16 %v317, %v310
        %v332 = vpack.c.bf16 %v318, %v311
        %v333 = vld [vmem:[#allocation4] sm:$0xff]
        %v334 = vld [vmem:[#allocation4 + $0x8] sm:$0xff]
        %v335 = vld [vmem:[#allocation4 + $0x10] sm:$0xff]
        %v336 = vld [vmem:[#allocation4 + $0x18] sm:$0xff]
        %v337 = vld [vmem:[#allocation4 + $0x20] sm:$0xff]
        %v338 = vld [vmem:[#allocation4 + $0x28] sm:$0xff]
        %v339 = vld [vmem:[#allocation4 + $0x30] sm:$0xff]
        %v340 = vld [vmem:[#allocation4 + $0x38] sm:$0xff]
        %v341 = vld [vmem:[#allocation4 + $0x40] sm:$0xff]
        %v342 = vld [vmem:[#allocation4 + $0x48] sm:$0xff]
        %v343 = vld [vmem:[#allocation4 + $0x50] sm:$0xff]
        %v344 = vld [vmem:[#allocation4 + $0x58] sm:$0xff]
        %v345 = vld [vmem:[#allocation4 + $0x60] sm:$0xff]
        %v346 = vld [vmem:[#allocation4 + $0x68] sm:$0xff]
        %v347 = vld [vmem:[#allocation4 + $0x70] sm:$0xff]
        %v348 = vld [vmem:[#allocation4 + $0x78] sm:$0xff]
        %v349 = vld [vmem:[#allocation4 + $0x80] sm:$0xff]
        %v350 = vld [vmem:[#allocation4 + $0x88] sm:$0xff]
        %v351 = vld [vmem:[#allocation4 + $0x90] sm:$0xff]
        %v352 = vld [vmem:[#allocation4 + $0x98] sm:$0xff]
        %v353 = vld [vmem:[#allocation4 + $0xa0] sm:$0xff]
        %v354 = vld [vmem:[#allocation4 + $0xa8] sm:$0xff]
        %v355 = vld [vmem:[#allocation4 + $0xb0] sm:$0xff]
        %v356 = vld [vmem:[#allocation4 + $0xb8] sm:$0xff]
        %v357 = vld [vmem:[#allocation4 + $0xc0] sm:$0xff]
        %v358 = vld [vmem:[#allocation4 + $0xc8] sm:$0xff]
        %v359 = vld [vmem:[#allocation4 + $0xd0] sm:$0xff]
        %v360 = vld [vmem:[#allocation4 + $0xd8] sm:$0xff]
        %v361 = vld [vmem:[#allocation4 + $0xe0] sm:$0xff]
        %v362 = vld [vmem:[#allocation4 + $0xe8] sm:$0xff]
        %v363 = vld [vmem:[#allocation4 + $0xf0] sm:$0xff]
        %v364 = vld [vmem:[#allocation4 + $0xf8] sm:$0xff]
        %v365 = vld [vmem:[#allocation4 + $0x100] sm:$0xff]
        %v366 = vld [vmem:[#allocation4 + $0x108] sm:$0xff]
        %v367 = vld [vmem:[#allocation4 + $0x110] sm:$0xff]
        %v368 = vld [vmem:[#allocation4 + $0x118] sm:$0xff]
        %v369 = vld [vmem:[#allocation4 + $0x120] sm:$0xff]
        %v370 = vld [vmem:[#allocation4 + $0x128] sm:$0xff]
        %v371 = vld [vmem:[#allocation4 + $0x130] sm:$0xff]
        %v372 = vld [vmem:[#allocation4 + $0x138] sm:$0xff]
        %v373 = vld [vmem:[#allocation4 + $0x140] sm:$0xff]
        %v374 = vld [vmem:[#allocation4 + $0x148] sm:$0xff]
        %v375 = vld [vmem:[#allocation4 + $0x150] sm:$0xff]
        %v376 = vld [vmem:[#allocation4 + $0x158] sm:$0xff]
        %v377 = vld [vmem:[#allocation4 + $0x160] sm:$0xff]
        %v378 = vld [vmem:[#allocation4 + $0x168] sm:$0xff]
        %v379 = vld [vmem:[#allocation4 + $0x170] sm:$0xff]
        %v380 = vld [vmem:[#allocation4 + $0x178] sm:$0xff]
        %v381 = vld [vmem:[#allocation4 + $0x180] sm:$0xff]
        %v382 = vld [vmem:[#allocation4 + $0x188] sm:$0xff]
        %v383 = vld [vmem:[#allocation4 + $0x190] sm:$0xff]
        %v384 = vld [vmem:[#allocation4 + $0x198] sm:$0xff]
        %v385 = vld [vmem:[#allocation4 + $0x1a0] sm:$0xff]
        %v386 = vld [vmem:[#allocation4 + $0x1a8] sm:$0xff]
        %v387 = vld [vmem:[#allocation4 + $0x1b0] sm:$0xff]
        %v388 = vld [vmem:[#allocation4 + $0x1b8] sm:$0xff]
        %v389 = vld [vmem:[#allocation4 + $0x1c0] sm:$0xff]
        %v390 = vld [vmem:[#allocation4 + $0x1c8] sm:$0xff]
        %v391 = vld [vmem:[#allocation4 + $0x1d0] sm:$0xff]
        %v392 = vld [vmem:[#allocation4 + $0x1d8] sm:$0xff]
        %v393 = vld [vmem:[#allocation4 + $0x1e0] sm:$0xff]
        %v394 = vld [vmem:[#allocation4 + $0x1e8] sm:$0xff]
        %v395 = vld [vmem:[#allocation4 + $0x1f0] sm:$0xff]
        %v396 = vld [vmem:[#allocation4 + $0x1f8] sm:$0xff]
        %v397 = vld [vmem:[#allocation4 + $0x200] sm:$0xff]
        %v398 = vld [vmem:[#allocation4 + $0x208] sm:$0xff]
        %v399 = vld [vmem:[#allocation4 + $0x210] sm:$0xff]
        %v400 = vld [vmem:[#allocation4 + $0x218] sm:$0xff]
        %v401 = vld [vmem:[#allocation4 + $0x220] sm:$0xff]
        %v402 = vld [vmem:[#allocation4 + $0x228] sm:$0xff]
        %v403 = vld [vmem:[#allocation4 + $0x230] sm:$0xff]
        %v404 = vld [vmem:[#allocation4 + $0x238] sm:$0xff]
        %v405 = vld [vmem:[#allocation4 + $0x240] sm:$0xff]
        %v406 = vld [vmem:[#allocation4 + $0x248] sm:$0xff]
        %v407 = vld [vmem:[#allocation4 + $0x250] sm:$0xff]
        %v408 = vld [vmem:[#allocation4 + $0x258] sm:$0xff]
        %v409 = vld [vmem:[#allocation4 + $0x260] sm:$0xff]
        %v410 = vld [vmem:[#allocation4 + $0x268] sm:$0xff]
        %v411 = vld [vmem:[#allocation4 + $0x270] sm:$0xff]
        %v412 = vld [vmem:[#allocation4 + $0x278] sm:$0xff]
        %v413 = vld [vmem:[#allocation4 + $0x280] sm:$0xff]
        %v414 = vld [vmem:[#allocation4 + $0x288] sm:$0xff]
        %v415 = vld [vmem:[#allocation4 + $0x290] sm:$0xff]
        %v416 = vld [vmem:[#allocation4 + $0x298] sm:$0xff]
        %v417 = vld [vmem:[#allocation4 + $0x2a0] sm:$0xff]
        %v418 = vld [vmem:[#allocation4 + $0x2a8] sm:$0xff]
        %v419 = vld [vmem:[#allocation4 + $0x2b0] sm:$0xff]
        %v420 = vld [vmem:[#allocation4 + $0x2b8] sm:$0xff]
        %v421 = vld [vmem:[#allocation4 + $0x2c0] sm:$0xff]
        %v422 = vld [vmem:[#allocation4 + $0x2c8] sm:$0xff]
        %v423 = vld [vmem:[#allocation4 + $0x2d0] sm:$0xff]
        %v424 = vld [vmem:[#allocation4 + $0x2d8] sm:$0xff]
        %v425 = vld [vmem:[#allocation4 + $0x2e0] sm:$0xff]
        %v426 = vld [vmem:[#allocation4 + $0x2e8] sm:$0xff]
        %v427 = vld [vmem:[#allocation4 + $0x2f0] sm:$0xff]
        %v428 = vld [vmem:[#allocation4 + $0x2f8] sm:$0xff]
        %v429 = vld [vmem:[#allocation4 + $0x300] sm:$0xff]
        %v430 = vld [vmem:[#allocation4 + $0x308] sm:$0xff]
        %v431 = vld [vmem:[#allocation4 + $0x310] sm:$0xff]
        %v432 = vld [vmem:[#allocation4 + $0x318] sm:$0xff]
        %v433 = vld [vmem:[#allocation4 + $0x320] sm:$0xff]
        %v434 = vld [vmem:[#allocation4 + $0x328] sm:$0xff]
        %v435 = vld [vmem:[#allocation4 + $0x330] sm:$0xff]
        %v436 = vld [vmem:[#allocation4 + $0x338] sm:$0xff]
        %v437 = vld [vmem:[#allocation4 + $0x340] sm:$0xff]
        %v438 = vld [vmem:[#allocation4 + $0x348] sm:$0xff]
        %v439 = vld [vmem:[#allocation4 + $0x350] sm:$0xff]
        %v440 = vld [vmem:[#allocation4 + $0x358] sm:$0xff]
        %v441 = vld [vmem:[#allocation4 + $0x360] sm:$0xff]
        %v442 = vld [vmem:[#allocation4 + $0x368] sm:$0xff]
        %v443 = vld [vmem:[#allocation4 + $0x370] sm:$0xff]
        %v444 = vld [vmem:[#allocation4 + $0x378] sm:$0xff]
        %v445 = vld [vmem:[#allocation4 + $0x380] sm:$0xff]
        %v446 = vld [vmem:[#allocation4 + $0x388] sm:$0xff]
        %v447 = vld [vmem:[#allocation4 + $0x390] sm:$0xff]
        %v448 = vld [vmem:[#allocation4 + $0x398] sm:$0xff]
        %v449 = vld [vmem:[#allocation4 + $0x3a0] sm:$0xff]
        %v450 = vld [vmem:[#allocation4 + $0x3a8] sm:$0xff]
        %v451 = vld [vmem:[#allocation4 + $0x3b0] sm:$0xff]
        %v452 = vld [vmem:[#allocation4 + $0x3b8] sm:$0xff]
        %v453 = vld [vmem:[#allocation4 + $0x3c0] sm:$0xff]
        %v454 = vld [vmem:[#allocation4 + $0x3c8] sm:$0xff]
        %v455 = vld [vmem:[#allocation4 + $0x3d0] sm:$0xff]
        %v456 = vld [vmem:[#allocation4 + $0x3d8] sm:$0xff]
        %v457 = vld [vmem:[#allocation4 + $0x3e0] sm:$0xff]
        %v458 = vld [vmem:[#allocation4 + $0x3e8] sm:$0xff]
        %v459 = vld [vmem:[#allocation4 + $0x3f0] sm:$0xff]
        %v460 = vld [vmem:[#allocation4 + $0x3f8] sm:$0xff]
        %v461 = vld [vmem:[#allocation4 + $0x400] sm:$0xff]
        %v462 = vld [vmem:[#allocation4 + $0x408] sm:$0xff]
        %v463 = vld [vmem:[#allocation4 + $0x410] sm:$0xff]
        %v464 = vld [vmem:[#allocation4 + $0x418] sm:$0xff]
        %v465 = vld [vmem:[#allocation4 + $0x420] sm:$0xff]
        %v466 = vld [vmem:[#allocation4 + $0x428] sm:$0xff]
        %v467 = vld [vmem:[#allocation4 + $0x430] sm:$0xff]
        %v468 = vld [vmem:[#allocation4 + $0x438] sm:$0xff]
        %v469 = vld [vmem:[#allocation4 + $0x440] sm:$0xff]
        %v470 = vld [vmem:[#allocation4 + $0x448] sm:$0xff]
        %v471 = vld [vmem:[#allocation4 + $0x450] sm:$0xff]
        %v472 = vld [vmem:[#allocation4 + $0x458] sm:$0xff]
        %v473 = vld [vmem:[#allocation4 + $0x460] sm:$0xff]
        %v474 = vld [vmem:[#allocation4 + $0x468] sm:$0xff]
        %v475 = vld [vmem:[#allocation4 + $0x470] sm:$0xff]
        %v476 = vld [vmem:[#allocation4 + $0x478] sm:$0xff]
        %v477 = vld [vmem:[#allocation4 + $0x480] sm:$0xff]
        %v478 = vld [vmem:[#allocation4 + $0x488] sm:$0xff]
        %v479 = vld [vmem:[#allocation4 + $0x490] sm:$0xff]
        %v480 = vld [vmem:[#allocation4 + $0x498] sm:$0xff]
        %v481 = vld [vmem:[#allocation4 + $0x4a0] sm:$0xff]
        %v482 = vld [vmem:[#allocation4 + $0x4a8] sm:$0xff]
        %v483 = vld [vmem:[#allocation4 + $0x4b0] sm:$0xff]
        %v484 = vld [vmem:[#allocation4 + $0x4b8] sm:$0xff]
        %v485 = vld [vmem:[#allocation4 + $0x4c0] sm:$0xff]
        %v486 = vld [vmem:[#allocation4 + $0x4c8] sm:$0xff]
        %v487 = vld [vmem:[#allocation4 + $0x4d0] sm:$0xff]
        %v488 = vld [vmem:[#allocation4 + $0x4d8] sm:$0xff]
        %v489 = vld [vmem:[#allocation4 + $0x4e0] sm:$0xff]
        %v490 = vld [vmem:[#allocation4 + $0x4e8] sm:$0xff]
        %v491 = vld [vmem:[#allocation4 + $0x4f0] sm:$0xff]
        %v492 = vld [vmem:[#allocation4 + $0x4f8] sm:$0xff]
        %v493 = vld [vmem:[#allocation4 + $0x500] sm:$0xff]
        %v494 = vld [vmem:[#allocation4 + $0x508] sm:$0xff]
        %v495 = vld [vmem:[#allocation4 + $0x510] sm:$0xff]
        %v496 = vld [vmem:[#allocation4 + $0x518] sm:$0xff]
        %v497 = vld [vmem:[#allocation4 + $0x520] sm:$0xff]
        %v498 = vld [vmem:[#allocation4 + $0x528] sm:$0xff]
        %v499 = vld [vmem:[#allocation4 + $0x530] sm:$0xff]
        %v500 = vld [vmem:[#allocation4 + $0x538] sm:$0xff]
        %v501 = vld [vmem:[#allocation4 + $0x540] sm:$0xff]
        %v502 = vld [vmem:[#allocation4 + $0x548] sm:$0xff]
        %v503 = vld [vmem:[#allocation4 + $0x550] sm:$0xff]
        %v504 = vld [vmem:[#allocation4 + $0x558] sm:$0xff]
        %v505 = vld [vmem:[#allocation4 + $0x560] sm:$0xff]
        %v506 = vld [vmem:[#allocation4 + $0x568] sm:$0xff]
        %v507 = vld [vmem:[#allocation4 + $0x570] sm:$0xff]
        %v508 = vld [vmem:[#allocation4 + $0x578] sm:$0xff]
        %v509 = vld [vmem:[#allocation4 + $0x580] sm:$0xff]
        %v510 = vld [vmem:[#allocation4 + $0x588] sm:$0xff]
        %v511 = vld [vmem:[#allocation4 + $0x590] sm:$0xff]
        %v512 = vld [vmem:[#allocation4 + $0x598] sm:$0xff]
        %v513 = vld [vmem:[#allocation4 + $0x5a0] sm:$0xff]
        %v514 = vld [vmem:[#allocation4 + $0x5a8] sm:$0xff]
        %v515 = vld [vmem:[#allocation4 + $0x5b0] sm:$0xff]
        %v516 = vld [vmem:[#allocation4 + $0x5b8] sm:$0xff]
        %v517 = vld [vmem:[#allocation4 + $0x5c0] sm:$0xff]
        %v518 = vld [vmem:[#allocation4 + $0x5c8] sm:$0xff]
        %v519 = vld [vmem:[#allocation4 + $0x5d0] sm:$0xff]
        %v520 = vld [vmem:[#allocation4 + $0x5d8] sm:$0xff]
        %v521 = vld [vmem:[#allocation4 + $0x5e0] sm:$0xff]
        %v522 = vld [vmem:[#allocation4 + $0x5e8] sm:$0xff]
        %v523 = vld [vmem:[#allocation4 + $0x5f0] sm:$0xff]
        %v524 = vld [vmem:[#allocation4 + $0x5f8] sm:$0xff]
        %v525 = vld [vmem:[#allocation4 + $0x600] sm:$0xff]
        %v526 = vld [vmem:[#allocation4 + $0x608] sm:$0xff]
        %v527 = vld [vmem:[#allocation4 + $0x610] sm:$0xff]
        %v528 = vld [vmem:[#allocation4 + $0x618] sm:$0xff]
        %v529 = vld [vmem:[#allocation6] sm:$0xf]
        %v531 = vlaneseq
        %v532 = vshrl.u32 %v531, 7
        %v533 = vsub.s32 0, %v532
        %v534 = vrot.slane %v529, %v533
        %v535 = vlaneseq
        %v536 = vshrl.u32 %v535, 7
        %v537 = vsub.s32 1, %v536
        %v538 = vrot.slane %v529, %v537
        %v539 = vlaneseq
        %v540 = vshrl.u32 %v539, 7
        %v541 = vsub.s32 2, %v540
        %v542 = vrot.slane %v529, %v541
        %v543 = vlaneseq
        %v544 = vshrl.u32 %v543, 7
        %v545 = vsub.s32 3, %v544
        %v546 = vrot.slane %v529, %v545
        %v747 = vunpack.c.l.b16 %v333
        %v748 = vunpack.c.h.b16 %v333
        %v749 = vunpack.c.l.b16 %v334
        %v750 = vunpack.c.h.b16 %v334
        %v751 = vunpack.c.l.b16 %v335
        %v752 = vunpack.c.h.b16 %v335
        %v753 = vunpack.c.l.b16 %v336
        %v754 = vunpack.c.h.b16 %v336
        %v755 = vunpack.c.l.b16 %v337
        %v756 = vunpack.c.h.b16 %v337
        %v757 = vunpack.c.l.b16 %v338
        %v758 = vunpack.c.h.b16 %v338
        %v759 = vunpack.c.l.b16 %v339
        %v760 = vunpack.c.h.b16 %v339
        %v761 = vunpack.c.l.b16 %v340
        %v762 = vunpack.c.h.b16 %v340
        %v763 = vunpack.c.l.b16 %v341
        %v764 = vunpack.c.h.b16 %v341
        %v765 = vunpack.c.l.b16 %v342
        %v766 = vunpack.c.h.b16 %v342
        %v767 = vunpack.c.l.b16 %v343
        %v768 = vunpack.c.h.b16 %v343
        %v769 = vunpack.c.l.b16 %v344
        %v770 = vunpack.c.h.b16 %v344
        %v771 = vunpack.c.l.b16 %v345
        %v772 = vunpack.c.h.b16 %v345
        %v773 = vunpack.c.l.b16 %v346
        %v774 = vunpack.c.h.b16 %v346
        %v775 = vunpack.c.l.b16 %v347
        %v776 = vunpack.c.h.b16 %v347
        %v777 = vunpack.c.l.b16 %v348
        %v778 = vunpack.c.h.b16 %v348
        %v779 = vunpack.c.l.b16 %v349
        %v780 = vunpack.c.h.b16 %v349
        %v781 = vunpack.c.l.b16 %v350
        %v782 = vunpack.c.h.b16 %v350
        %v783 = vunpack.c.l.b16 %v351
        %v784 = vunpack.c.h.b16 %v351
        %v785 = vunpack.c.l.b16 %v352
        %v786 = vunpack.c.h.b16 %v352
        %v787 = vunpack.c.l.b16 %v353
        %v788 = vunpack.c.h.b16 %v353
        %v789 = vunpack.c.l.b16 %v354
        %v790 = vunpack.c.h.b16 %v354
        %v791 = vunpack.c.l.b16 %v355
        %v792 = vunpack.c.h.b16 %v355
        %v793 = vunpack.c.l.b16 %v356
        %v794 = vunpack.c.h.b16 %v356
        %v795 = vunpack.c.l.b16 %v357
        %v796 = vunpack.c.h.b16 %v357
        %v797 = vunpack.c.l.b16 %v358
        %v798 = vunpack.c.h.b16 %v358
        %v799 = vunpack.c.l.b16 %v359
        %v800 = vunpack.c.h.b16 %v359
        %v801 = vunpack.c.l.b16 %v360
        %v802 = vunpack.c.h.b16 %v360
        %v803 = vunpack.c.l.b16 %v361
        %v804 = vunpack.c.h.b16 %v361
        %v805 = vunpack.c.l.b16 %v362
        %v806 = vunpack.c.h.b16 %v362
        %v807 = vunpack.c.l.b16 %v363
        %v808 = vunpack.c.h.b16 %v363
        %v809 = vunpack.c.l.b16 %v364
        %v810 = vunpack.c.h.b16 %v364
        %v811 = vunpack.c.l.b16 %v365
        %v812 = vunpack.c.h.b16 %v365
        %v813 = vunpack.c.l.b16 %v366
        %v814 = vunpack.c.h.b16 %v366
        %v815 = vunpack.c.l.b16 %v367
        %v816 = vunpack.c.h.b16 %v367
        %v817 = vunpack.c.l.b16 %v368
        %v818 = vunpack.c.h.b16 %v368
        %v819 = vunpack.c.l.b16 %v369
        %v820 = vunpack.c.h.b16 %v369
        %v821 = vunpack.c.l.b16 %v370
        %v822 = vunpack.c.h.b16 %v370
        %v823 = vunpack.c.l.b16 %v371
        %v824 = vunpack.c.h.b16 %v371
        %v825 = vunpack.c.l.b16 %v372
        %v826 = vunpack.c.h.b16 %v372
        %v827 = vunpack.c.l.b16 %v373
        %v828 = vunpack.c.h.b16 %v373
        %v829 = vunpack.c.l.b16 %v374
        %v830 = vunpack.c.h.b16 %v374
        %v831 = vunpack.c.l.b16 %v375
        %v832 = vunpack.c.h.b16 %v375
        %v833 = vunpack.c.l.b16 %v376
        %v834 = vunpack.c.h.b16 %v376
        %v835 = vunpack.c.l.b16 %v377
        %v836 = vunpack.c.h.b16 %v377
        %v837 = vunpack.c.l.b16 %v378
        %v838 = vunpack.c.h.b16 %v378
        %v839 = vunpack.c.l.b16 %v379
        %v840 = vunpack.c.h.b16 %v379
        %v841 = vunpack.c.l.b16 %v380
        %v842 = vunpack.c.h.b16 %v380
        %v843 = vunpack.c.l.b16 %v381
        %v844 = vunpack.c.h.b16 %v381
        %v845 = vunpack.c.l.b16 %v382
        %v846 = vunpack.c.h.b16 %v382
        %v847 = vunpack.c.l.b16 %v383
        %v848 = vunpack.c.h.b16 %v383
        %v849 = vunpack.c.l.b16 %v384
        %v850 = vunpack.c.h.b16 %v384
        %v851 = vunpack.c.l.b16 %v385
        %v852 = vunpack.c.h.b16 %v385
        %v853 = vunpack.c.l.b16 %v386
        %v854 = vunpack.c.h.b16 %v386
        %v855 = vunpack.c.l.b16 %v387
        %v856 = vunpack.c.h.b16 %v387
        %v857 = vunpack.c.l.b16 %v388
        %v858 = vunpack.c.h.b16 %v388
        %v859 = vunpack.c.l.b16 %v389
        %v860 = vunpack.c.h.b16 %v389
        %v861 = vunpack.c.l.b16 %v390
        %v862 = vunpack.c.h.b16 %v390
        %v863 = vunpack.c.l.b16 %v391
        %v864 = vunpack.c.h.b16 %v391
        %v865 = vunpack.c.l.b16 %v392
        %v866 = vunpack.c.h.b16 %v392
        %v867 = vunpack.c.l.b16 %v393
        %v868 = vunpack.c.h.b16 %v393
        %v869 = vunpack.c.l.b16 %v394
        %v870 = vunpack.c.h.b16 %v394
        %v871 = vunpack.c.l.b16 %v395
        %v872 = vunpack.c.h.b16 %v395
        %v873 = vunpack.c.l.b16 %v396
        %v874 = vunpack.c.h.b16 %v396
        %v875 = vunpack.c.l.b16 %v397
        %v876 = vunpack.c.h.b16 %v397
        %v877 = vunpack.c.l.b16 %v398
        %v878 = vunpack.c.h.b16 %v398
        %v879 = vunpack.c.l.b16 %v399
        %v880 = vunpack.c.h.b16 %v399
        %v881 = vunpack.c.l.b16 %v400
        %v882 = vunpack.c.h.b16 %v400
        %v883 = vunpack.c.l.b16 %v401
        %v884 = vunpack.c.h.b16 %v401
        %v885 = vunpack.c.l.b16 %v402
        %v886 = vunpack.c.h.b16 %v402
        %v887 = vunpack.c.l.b16 %v403
        %v888 = vunpack.c.h.b16 %v403
        %v889 = vunpack.c.l.b16 %v404
        %v890 = vunpack.c.h.b16 %v404
        %v891 = vunpack.c.l.b16 %v405
        %v892 = vunpack.c.h.b16 %v405
        %v893 = vunpack.c.l.b16 %v406
        %v894 = vunpack.c.h.b16 %v406
        %v895 = vunpack.c.l.b16 %v407
        %v896 = vunpack.c.h.b16 %v407
        %v897 = vunpack.c.l.b16 %v408
        %v898 = vunpack.c.h.b16 %v408
        %v899 = vunpack.c.l.b16 %v409
        %v900 = vunpack.c.h.b16 %v409
        %v901 = vunpack.c.l.b16 %v410
        %v902 = vunpack.c.h.b16 %v410
        %v903 = vunpack.c.l.b16 %v411
        %v904 = vunpack.c.h.b16 %v411
        %v905 = vunpack.c.l.b16 %v412
        %v906 = vunpack.c.h.b16 %v412
        %v907 = vunpack.c.l.b16 %v413
        %v908 = vunpack.c.h.b16 %v413
        %v909 = vunpack.c.l.b16 %v414
        %v910 = vunpack.c.h.b16 %v414
        %v911 = vunpack.c.l.b16 %v415
        %v912 = vunpack.c.h.b16 %v415
        %v913 = vunpack.c.l.b16 %v416
        %v914 = vunpack.c.h.b16 %v416
        %v915 = vunpack.c.l.b16 %v417
        %v916 = vunpack.c.h.b16 %v417
        %v917 = vunpack.c.l.b16 %v418
        %v918 = vunpack.c.h.b16 %v418
        %v919 = vunpack.c.l.b16 %v419
        %v920 = vunpack.c.h.b16 %v419
        %v921 = vunpack.c.l.b16 %v420
        %v922 = vunpack.c.h.b16 %v420
        %v923 = vunpack.c.l.b16 %v421
        %v924 = vunpack.c.h.b16 %v421
        %v925 = vunpack.c.l.b16 %v422
        %v926 = vunpack.c.h.b16 %v422
        %v927 = vunpack.c.l.b16 %v423
        %v928 = vunpack.c.h.b16 %v423
        %v929 = vunpack.c.l.b16 %v424
        %v930 = vunpack.c.h.b16 %v424
        %v931 = vunpack.c.l.b16 %v425
        %v932 = vunpack.c.h.b16 %v425
        %v933 = vunpack.c.l.b16 %v426
        %v934 = vunpack.c.h.b16 %v426
        %v935 = vunpack.c.l.b16 %v427
        %v936 = vunpack.c.h.b16 %v427
        %v937 = vunpack.c.l.b16 %v428
        %v938 = vunpack.c.h.b16 %v428
        %v939 = vunpack.c.l.b16 %v429
        %v940 = vunpack.c.h.b16 %v429
        %v941 = vunpack.c.l.b16 %v430
        %v942 = vunpack.c.h.b16 %v430
        %v943 = vunpack.c.l.b16 %v431
        %v944 = vunpack.c.h.b16 %v431
        %v945 = vunpack.c.l.b16 %v432
        %v946 = vunpack.c.h.b16 %v432
        %v947 = vunpack.c.l.b16 %v433
        %v948 = vunpack.c.h.b16 %v433
        %v949 = vunpack.c.l.b16 %v434
        %v950 = vunpack.c.h.b16 %v434
        %v951 = vunpack.c.l.b16 %v435
        %v952 = vunpack.c.h.b16 %v435
        %v953 = vunpack.c.l.b16 %v436
        %v954 = vunpack.c.h.b16 %v436
        %v955 = vunpack.c.l.b16 %v437
        %v956 = vunpack.c.h.b16 %v437
        %v957 = vunpack.c.l.b16 %v438
        %v958 = vunpack.c.h.b16 %v438
        %v959 = vunpack.c.l.b16 %v439
        %v960 = vunpack.c.h.b16 %v439
        %v961 = vunpack.c.l.b16 %v440
        %v962 = vunpack.c.h.b16 %v440
        %v963 = vunpack.c.l.b16 %v441
        %v964 = vunpack.c.h.b16 %v441
        %v965 = vunpack.c.l.b16 %v442
        %v966 = vunpack.c.h.b16 %v442
        %v967 = vunpack.c.l.b16 %v443
        %v968 = vunpack.c.h.b16 %v443
        %v969 = vunpack.c.l.b16 %v444
        %v970 = vunpack.c.h.b16 %v444
        %v971 = vunpack.c.l.b16 %v445
        %v972 = vunpack.c.h.b16 %v445
        %v973 = vunpack.c.l.b16 %v446
        %v974 = vunpack.c.h.b16 %v446
        %v975 = vunpack.c.l.b16 %v447
        %v976 = vunpack.c.h.b16 %v447
        %v977 = vunpack.c.l.b16 %v448
        %v978 = vunpack.c.h.b16 %v448
        %v979 = vunpack.c.l.b16 %v449
        %v980 = vunpack.c.h.b16 %v449
        %v981 = vunpack.c.l.b16 %v450
        %v982 = vunpack.c.h.b16 %v450
        %v983 = vunpack.c.l.b16 %v451
        %v984 = vunpack.c.h.b16 %v451
        %v985 = vunpack.c.l.b16 %v452
        %v986 = vunpack.c.h.b16 %v452
        %v987 = vunpack.c.l.b16 %v453
        %v988 = vunpack.c.h.b16 %v453
        %v989 = vunpack.c.l.b16 %v454
        %v990 = vunpack.c.h.b16 %v454
        %v991 = vunpack.c.l.b16 %v455
        %v992 = vunpack.c.h.b16 %v455
        %v993 = vunpack.c.l.b16 %v456
        %v994 = vunpack.c.h.b16 %v456
        %v995 = vunpack.c.l.b16 %v457
        %v996 = vunpack.c.h.b16 %v457
        %v997 = vunpack.c.l.b16 %v458
        %v998 = vunpack.c.h.b16 %v458
        %v999 = vunpack.c.l.b16 %v459
        %v1000 = vunpack.c.h.b16 %v459
        %v1001 = vunpack.c.l.b16 %v460
        %v1002 = vunpack.c.h.b16 %v460
        %v1003 = vunpack.c.l.b16 %v461
        %v1004 = vunpack.c.h.b16 %v461
        %v1005 = vunpack.c.l.b16 %v462
        %v1006 = vunpack.c.h.b16 %v462
        %v1007 = vunpack.c.l.b16 %v463
        %v1008 = vunpack.c.h.b16 %v463
        %v1009 = vunpack.c.l.b16 %v464
        %v1010 = vunpack.c.h.b16 %v464
        %v1011 = vunpack.c.l.b16 %v465
        %v1012 = vunpack.c.h.b16 %v465
        %v1013 = vunpack.c.l.b16 %v466
        %v1014 = vunpack.c.h.b16 %v466
        %v1015 = vunpack.c.l.b16 %v467
        %v1016 = vunpack.c.h.b16 %v467
        %v1017 = vunpack.c.l.b16 %v468
        %v1018 = vunpack.c.h.b16 %v468
        %v1019 = vunpack.c.l.b16 %v469
        %v1020 = vunpack.c.h.b16 %v469
        %v1021 = vunpack.c.l.b16 %v470
        %v1022 = vunpack.c.h.b16 %v470
        %v1023 = vunpack.c.l.b16 %v471
        %v1024 = vunpack.c.h.b16 %v471
        %v1025 = vunpack.c.l.b16 %v472
        %v1026 = vunpack.c.h.b16 %v472
        %v1027 = vunpack.c.l.b16 %v473
        %v1028 = vunpack.c.h.b16 %v473
        %v1029 = vunpack.c.l.b16 %v474
        %v1030 = vunpack.c.h.b16 %v474
        %v1031 = vunpack.c.l.b16 %v475
        %v1032 = vunpack.c.h.b16 %v475
        %v1033 = vunpack.c.l.b16 %v476
        %v1034 = vunpack.c.h.b16 %v476
        %v1035 = vunpack.c.l.b16 %v477
        %v1036 = vunpack.c.h.b16 %v477
        %v1037 = vunpack.c.l.b16 %v478
        %v1038 = vunpack.c.h.b16 %v478
        %v1039 = vunpack.c.l.b16 %v479
        %v1040 = vunpack.c.h.b16 %v479
        %v1041 = vunpack.c.l.b16 %v480
        %v1042 = vunpack.c.h.b16 %v480
        %v1043 = vunpack.c.l.b16 %v481
        %v1044 = vunpack.c.h.b16 %v481
        %v1045 = vunpack.c.l.b16 %v482
        %v1046 = vunpack.c.h.b16 %v482
        %v1047 = vunpack.c.l.b16 %v483
        %v1048 = vunpack.c.h.b16 %v483
        %v1049 = vunpack.c.l.b16 %v484
        %v1050 = vunpack.c.h.b16 %v484
        %v1051 = vunpack.c.l.b16 %v485
        %v1052 = vunpack.c.h.b16 %v485
        %v1053 = vunpack.c.l.b16 %v486
        %v1054 = vunpack.c.h.b16 %v486
        %v1055 = vunpack.c.l.b16 %v487
        %v1056 = vunpack.c.h.b16 %v487
        %v1057 = vunpack.c.l.b16 %v488
        %v1058 = vunpack.c.h.b16 %v488
        %v1059 = vunpack.c.l.b16 %v489
        %v1060 = vunpack.c.h.b16 %v489
        %v1061 = vunpack.c.l.b16 %v490
        %v1062 = vunpack.c.h.b16 %v490
        %v1063 = vunpack.c.l.b16 %v491
        %v1064 = vunpack.c.h.b16 %v491
        %v1065 = vunpack.c.l.b16 %v492
        %v1066 = vunpack.c.h.b16 %v492
        %v1067 = vunpack.c.l.b16 %v493
        %v1068 = vunpack.c.h.b16 %v493
        %v1069 = vunpack.c.l.b16 %v494
        %v1070 = vunpack.c.h.b16 %v494
        %v1071 = vunpack.c.l.b16 %v495
        %v1072 = vunpack.c.h.b16 %v495
        %v1073 = vunpack.c.l.b16 %v496
        %v1074 = vunpack.c.h.b16 %v496
        %v1075 = vunpack.c.l.b16 %v497
        %v1076 = vunpack.c.h.b16 %v497
        %v1077 = vunpack.c.l.b16 %v498
        %v1078 = vunpack.c.h.b16 %v498
        %v1079 = vunpack.c.l.b16 %v499
        %v1080 = vunpack.c.h.b16 %v499
        %v1081 = vunpack.c.l.b16 %v500
        %v1082 = vunpack.c.h.b16 %v500
        %v1083 = vunpack.c.l.b16 %v501
        %v1084 = vunpack.c.h.b16 %v501
        %v1085 = vunpack.c.l.b16 %v502
        %v1086 = vunpack.c.h.b16 %v502
        %v1087 = vunpack.c.l.b16 %v503
        %v1088 = vunpack.c.h.b16 %v503
        %v1089 = vunpack.c.l.b16 %v504
        %v1090 = vunpack.c.h.b16 %v504
        %v1091 = vunpack.c.l.b16 %v505
        %v1092 = vunpack.c.h.b16 %v505
        %v1093 = vunpack.c.l.b16 %v506
        %v1094 = vunpack.c.h.b16 %v506
        %v1095 = vunpack.c.l.b16 %v507
        %v1096 = vunpack.c.h.b16 %v507
        %v1097 = vunpack.c.l.b16 %v508
        %v1098 = vunpack.c.h.b16 %v508
        %v1099 = vunpack.c.l.b16 %v509
        %v1100 = vunpack.c.h.b16 %v509
        %v1101 = vunpack.c.l.b16 %v510
        %v1102 = vunpack.c.h.b16 %v510
        %v1103 = vunpack.c.l.b16 %v511
        %v1104 = vunpack.c.h.b16 %v511
        %v1105 = vunpack.c.l.b16 %v512
        %v1106 = vunpack.c.h.b16 %v512
        %v1107 = vunpack.c.l.b16 %v513
        %v1108 = vunpack.c.h.b16 %v513
        %v1109 = vunpack.c.l.b16 %v514
        %v1110 = vunpack.c.h.b16 %v514
        %v1111 = vunpack.c.l.b16 %v515
        %v1112 = vunpack.c.h.b16 %v515
        %v1113 = vunpack.c.l.b16 %v516
        %v1114 = vunpack.c.h.b16 %v516
        %v1115 = vunpack.c.l.b16 %v517
        %v1116 = vunpack.c.h.b16 %v517
        %v1117 = vunpack.c.l.b16 %v518
        %v1118 = vunpack.c.h.b16 %v518
        %v1119 = vunpack.c.l.b16 %v519
        %v1120 = vunpack.c.h.b16 %v519
        %v1121 = vunpack.c.l.b16 %v520
        %v1122 = vunpack.c.h.b16 %v520
        %v1123 = vunpack.c.l.b16 %v521
        %v1124 = vunpack.c.h.b16 %v521
        %v1125 = vunpack.c.l.b16 %v522
        %v1126 = vunpack.c.h.b16 %v522
        %v1127 = vunpack.c.l.b16 %v523
        %v1128 = vunpack.c.h.b16 %v523
        %v1129 = vunpack.c.l.b16 %v524
        %v1130 = vunpack.c.h.b16 %v524
        %v1131 = vunpack.c.l.b16 %v525
        %v1132 = vunpack.c.h.b16 %v525
        %v1133 = vunpack.c.l.b16 %v526
        %v1134 = vunpack.c.h.b16 %v526
        %v1135 = vunpack.c.l.b16 %v527
        %v1136 = vunpack.c.h.b16 %v527
        %v1137 = vunpack.c.l.b16 %v528
        %v1138 = vunpack.c.h.b16 %v528
        %v1139 = vpack.c.b16 %v751, %v747
        %v1140 = vpack.c.b16 %v752, %v748
        %v1141 = vpack.c.b16 %v753, %v749
        %v1142 = vpack.c.b16 %v754, %v750
        %v1143 = vpack.c.b16 %v759, %v755
        %v1144 = vpack.c.b16 %v760, %v756
        %v1145 = vpack.c.b16 %v761, %v757
        %v1146 = vpack.c.b16 %v762, %v758
        %v1147 = vpack.c.b16 %v767, %v763
        %v1148 = vpack.c.b16 %v768, %v764
        %v1149 = vpack.c.b16 %v769, %v765
        %v1150 = vpack.c.b16 %v770, %v766
        %v1151 = vpack.c.b16 %v775, %v771
        %v1152 = vpack.c.b16 %v776, %v772
        %v1153 = vpack.c.b16 %v777, %v773
        %v1154 = vpack.c.b16 %v778, %v774
        %v1155 = vpack.c.b16 %v783, %v779
        %v1156 = vpack.c.b16 %v784, %v780
        %v1157 = vpack.c.b16 %v785, %v781
        %v1158 = vpack.c.b16 %v786, %v782
        %v1159 = vpack.c.b16 %v791, %v787
        %v1160 = vpack.c.b16 %v792, %v788
        %v1161 = vpack.c.b16 %v793, %v789
        %v1162 = vpack.c.b16 %v794, %v790
        %v1163 = vpack.c.b16 %v799, %v795
        %v1164 = vpack.c.b16 %v800, %v796
        %v1165 = vpack.c.b16 %v801, %v797
        %v1166 = vpack.c.b16 %v802, %v798
        %v1167 = vpack.c.b16 %v807, %v803
        %v1168 = vpack.c.b16 %v808, %v804
        %v1169 = vpack.c.b16 %v809, %v805
        %v1170 = vpack.c.b16 %v810, %v806
        %v1171 = vpack.c.b16 %v815, %v811
        %v1172 = vpack.c.b16 %v816, %v812
        %v1173 = vpack.c.b16 %v817, %v813
        %v1174 = vpack.c.b16 %v818, %v814
        %v1175 = vpack.c.b16 %v823, %v819
        %v1176 = vpack.c.b16 %v824, %v820
        %v1177 = vpack.c.b16 %v825, %v821
        %v1178 = vpack.c.b16 %v826, %v822
        %v1179 = vpack.c.b16 %v831, %v827
        %v1180 = vpack.c.b16 %v832, %v828
        %v1181 = vpack.c.b16 %v833, %v829
        %v1182 = vpack.c.b16 %v834, %v830
        %v1183 = vpack.c.b16 %v839, %v835
        %v1184 = vpack.c.b16 %v840, %v836
        %v1185 = vpack.c.b16 %v841, %v837
        %v1186 = vpack.c.b16 %v842, %v838
        %v1187 = vpack.c.b16 %v847, %v843
        %v1188 = vpack.c.b16 %v848, %v844
        %v1189 = vpack.c.b16 %v849, %v845
        %v1190 = vpack.c.b16 %v850, %v846
        %v1191 = vpack.c.b16 %v855, %v851
        %v1192 = vpack.c.b16 %v856, %v852
        %v1193 = vpack.c.b16 %v857, %v853
        %v1194 = vpack.c.b16 %v858, %v854
        %v1195 = vpack.c.b16 %v863, %v859
        %v1196 = vpack.c.b16 %v864, %v860
        %v1197 = vpack.c.b16 %v865, %v861
        %v1198 = vpack.c.b16 %v866, %v862
        %v1199 = vpack.c.b16 %v871, %v867
        %v1200 = vpack.c.b16 %v872, %v868
        %v1201 = vpack.c.b16 %v873, %v869
        %v1202 = vpack.c.b16 %v874, %v870
        %v1203 = vpack.c.b16 %v879, %v875
        %v1204 = vpack.c.b16 %v880, %v876
        %v1205 = vpack.c.b16 %v881, %v877
        %v1206 = vpack.c.b16 %v882, %v878
        %v1207 = vpack.c.b16 %v887, %v883
        %v1208 = vpack.c.b16 %v888, %v884
        %v1209 = vpack.c.b16 %v889, %v885
        %v1210 = vpack.c.b16 %v890, %v886
        %v1211 = vpack.c.b16 %v895, %v891
        %v1212 = vpack.c.b16 %v896, %v892
        %v1213 = vpack.c.b16 %v897, %v893
        %v1214 = vpack.c.b16 %v898, %v894
        %v1215 = vpack.c.b16 %v903, %v899
        %v1216 = vpack.c.b16 %v904, %v900
        %v1217 = vpack.c.b16 %v905, %v901
        %v1218 = vpack.c.b16 %v906, %v902
        %v1219 = vpack.c.b16 %v911, %v907
        %v1220 = vpack.c.b16 %v912, %v908
        %v1221 = vpack.c.b16 %v913, %v909
        %v1222 = vpack.c.b16 %v914, %v910
        %v1223 = vpack.c.b16 %v919, %v915
        %v1224 = vpack.c.b16 %v920, %v916
        %v1225 = vpack.c.b16 %v921, %v917
        %v1226 = vpack.c.b16 %v922, %v918
        %v1227 = vpack.c.b16 %v927, %v923
        %v1228 = vpack.c.b16 %v928, %v924
        %v1229 = vpack.c.b16 %v929, %v925
        %v1230 = vpack.c.b16 %v930, %v926
        %v1231 = vpack.c.b16 %v935, %v931
        %v1232 = vpack.c.b16 %v936, %v932
        %v1233 = vpack.c.b16 %v937, %v933
        %v1234 = vpack.c.b16 %v938, %v934
        %v1235 = vpack.c.b16 %v943, %v939
        %v1236 = vpack.c.b16 %v944, %v940
        %v1237 = vpack.c.b16 %v945, %v941
        %v1238 = vpack.c.b16 %v946, %v942
        %v1239 = vpack.c.b16 %v951, %v947
        %v1240 = vpack.c.b16 %v952, %v948
        %v1241 = vpack.c.b16 %v953, %v949
        %v1242 = vpack.c.b16 %v954, %v950
        %v1243 = vpack.c.b16 %v959, %v955
        %v1244 = vpack.c.b16 %v960, %v956
        %v1245 = vpack.c.b16 %v961, %v957
        %v1246 = vpack.c.b16 %v962, %v958
        %v1247 = vpack.c.b16 %v967, %v963
        %v1248 = vpack.c.b16 %v968, %v964
        %v1249 = vpack.c.b16 %v969, %v965
        %v1250 = vpack.c.b16 %v970, %v966
        %v1251 = vpack.c.b16 %v975, %v971
        %v1252 = vpack.c.b16 %v976, %v972
        %v1253 = vpack.c.b16 %v977, %v973
        %v1254 = vpack.c.b16 %v978, %v974
        %v1255 = vpack.c.b16 %v983, %v979
        %v1256 = vpack.c.b16 %v984, %v980
        %v1257 = vpack.c.b16 %v985, %v981
        %v1258 = vpack.c.b16 %v986, %v982
        %v1259 = vpack.c.b16 %v991, %v987
        %v1260 = vpack.c.b16 %v992, %v988
        %v1261 = vpack.c.b16 %v993, %v989
        %v1262 = vpack.c.b16 %v994, %v990
        %v1263 = vpack.c.b16 %v999, %v995
        %v1264 = vpack.c.b16 %v1000, %v996
        %v1265 = vpack.c.b16 %v1001, %v997
        %v1266 = vpack.c.b16 %v1002, %v998
        %v1267 = vpack.c.b16 %v1007, %v1003
        %v1268 = vpack.c.b16 %v1008, %v1004
        %v1269 = vpack.c.b16 %v1009, %v1005
        %v1270 = vpack.c.b16 %v1010, %v1006
        %v1271 = vpack.c.b16 %v1015, %v1011
        %v1272 = vpack.c.b16 %v1016, %v1012
        %v1273 = vpack.c.b16 %v1017, %v1013
        %v1274 = vpack.c.b16 %v1018, %v1014
        %v1275 = vpack.c.b16 %v1023, %v1019
        %v1276 = vpack.c.b16 %v1024, %v1020
        %v1277 = vpack.c.b16 %v1025, %v1021
        %v1278 = vpack.c.b16 %v1026, %v1022
        %v1279 = vpack.c.b16 %v1031, %v1027
        %v1280 = vpack.c.b16 %v1032, %v1028
        %v1281 = vpack.c.b16 %v1033, %v1029
        %v1282 = vpack.c.b16 %v1034, %v1030
        %v1283 = vpack.c.b16 %v1039, %v1035
        %v1284 = vpack.c.b16 %v1040, %v1036
        %v1285 = vpack.c.b16 %v1041, %v1037
        %v1286 = vpack.c.b16 %v1042, %v1038
        %v1287 = vpack.c.b16 %v1047, %v1043
        %v1288 = vpack.c.b16 %v1048, %v1044
        %v1289 = vpack.c.b16 %v1049, %v1045
        %v1290 = vpack.c.b16 %v1050, %v1046
        %v1291 = vpack.c.b16 %v1055, %v1051
        %v1292 = vpack.c.b16 %v1056, %v1052
        %v1293 = vpack.c.b16 %v1057, %v1053
        %v1294 = vpack.c.b16 %v1058, %v1054
        %v1295 = vpack.c.b16 %v1063, %v1059
        %v1296 = vpack.c.b16 %v1064, %v1060
        %v1297 = vpack.c.b16 %v1065, %v1061
        %v1298 = vpack.c.b16 %v1066, %v1062
        %v1299 = vpack.c.b16 %v1071, %v1067
        %v1300 = vpack.c.b16 %v1072, %v1068
        %v1301 = vpack.c.b16 %v1073, %v1069
        %v1302 = vpack.c.b16 %v1074, %v1070
        %v1303 = vpack.c.b16 %v1079, %v1075
        %v1304 = vpack.c.b16 %v1080, %v1076
        %v1305 = vpack.c.b16 %v1081, %v1077
        %v1306 = vpack.c.b16 %v1082, %v1078
        %v1307 = vpack.c.b16 %v1087, %v1083
        %v1308 = vpack.c.b16 %v1088, %v1084
        %v1309 = vpack.c.b16 %v1089, %v1085
        %v1310 = vpack.c.b16 %v1090, %v1086
        %v1311 = vpack.c.b16 %v1095, %v1091
        %v1312 = vpack.c.b16 %v1096, %v1092
        %v1313 = vpack.c.b16 %v1097, %v1093
        %v1314 = vpack.c.b16 %v1098, %v1094
        %v1315 = vpack.c.b16 %v1103, %v1099
        %v1316 = vpack.c.b16 %v1104, %v1100
        %v1317 = vpack.c.b16 %v1105, %v1101
        %v1318 = vpack.c.b16 %v1106, %v1102
        %v1319 = vpack.c.b16 %v1111, %v1107
        %v1320 = vpack.c.b16 %v1112, %v1108
        %v1321 = vpack.c.b16 %v1113, %v1109
        %v1322 = vpack.c.b16 %v1114, %v1110
        %v1323 = vpack.c.b16 %v1119, %v1115
        %v1324 = vpack.c.b16 %v1120, %v1116
        %v1325 = vpack.c.b16 %v1121, %v1117
        %v1326 = vpack.c.b16 %v1122, %v1118
        %v1327 = vpack.c.b16 %v1127, %v1123
        %v1328 = vpack.c.b16 %v1128, %v1124
        %v1329 = vpack.c.b16 %v1129, %v1125
        %v1330 = vpack.c.b16 %v1130, %v1126
        %v1331 = vpack.c.b16 %v1135, %v1131
        %v1332 = vpack.c.b16 %v1136, %v1132
        %v1333 = vpack.c.b16 %v1137, %v1133
        %v1334 = vpack.c.b16 %v1138, %v1134
        %vm1531 = vcmask 130048
        %v1533 = vsel %vm1531, %v325, 0
        %v1536 = vsel %vm1531, %v332, 0
        %1538 = vmatprep.subr.bf16.mxu0 %v1168
        %1539 = vmatpush1.bf16.msra.mxu0 %v1167
        %1540 = vmatprep.subr.bf16.mxu0 %v1164
        %1541 = vmatpush1.bf16.msra.mxu0 %v1163
        %1542 = vmatprep.subr.bf16.mxu0 %v1160
        %1543 = vmatpush1.bf16.msra.mxu0 %v1159
        %1544 = vmatprep.subr.bf16.mxu0 %v1156
        %1545 = vmatpush1.bf16.msra.mxu0 %v1155
        %1546 = vmatprep.subr.bf16.mxu0 %v1152
        %1547 = vmatpush1.bf16.msra.mxu0 %v1151
        %1548 = vmatprep.subr.bf16.mxu0 %v1148
        %1549 = vmatpush1.bf16.msra.mxu0 %v1147
        %1550 = vmatprep.subr.bf16.mxu0 %v1144
        %1551 = vmatpush1.bf16.msra.mxu0 %v1143
        %1552 = vmatprep.subr.bf16.mxu0 %v1140
        %1553 = vmatpush1.bf16.msra.mxu0 %v1139
        %1554 = vmatprep.subr.bf16.mxu0 %v1200
        %1555 = vmatpush2.bf16.msra.mxu0 %v1199
        %1556 = vmatprep.subr.bf16.mxu0 %v1196
        %1557 = vmatpush2.bf16.msra.mxu0 %v1195
        %1558 = vmatprep.subr.bf16.mxu0 %v1192
        %1559 = vmatpush2.bf16.msra.mxu0 %v1191
        %1560 = vmatprep.subr.bf16.mxu0 %v1188
        %1561 = vmatpush2.bf16.msra.mxu0 %v1187
        %1562 = vmatprep.subr.bf16.mxu0 %v1184
        %1563 = vmatpush2.bf16.msra.mxu0 %v1183
        %1564 = vmatprep.subr.bf16.mxu0 %v1180
        %1565 = vmatpush2.bf16.msra.mxu0 %v1179
        %1566 = vmatprep.subr.bf16.mxu0 %v1176
        %1567 = vmatpush2.bf16.msra.mxu0 %v1175
        %1568 = vmatprep.subr.bf16.mxu0 %v1172
        %1569 = vmatpush2.bf16.msra.mxu0 %v1171
        %1570 = vmatprep.mubr.bf16.mxu0 %v320
        %1571 = vmatmul.mubr.bf16.gmra.mxu0 %v319
        %v1572 = vpop.f32.mrf.mxu0
        %v1573 = vadd.f32 %v534, %v1572
        %v1574 = vpop.f32.mrf.mxu0
        %v1575 = vadd.f32 %v538, %v1574
        %v1576 = vpop.f32.mrf.mxu0
        %v1577 = vadd.f32 %v534, %v1576
        %v1578 = vpop.f32.mrf.mxu0
        %v1579 = vadd.f32 %v538, %v1578
        %1580 = vmatprep.mubr.bf16.mxu0 %v327
        %1581 = vmatmul.mubr.bf16.gmra.mxu0 %v326
        %v1582 = vpop.f32.mrf.mxu0
        %v1583 = vadd.f32 %v534, %v1582
        %v1584 = vpop.f32.mrf.mxu0
        %v1585 = vadd.f32 %v538, %v1584
        %v1586 = vpop.f32.mrf.mxu0
        %v1587 = vadd.f32 %v534, %v1586
        %v1588 = vpop.f32.mrf.mxu0
        %v1589 = vadd.f32 %v538, %v1588
        %1590 = vdwg.mxu0
        %1591 = vmatprep.subr.bf16.mxu0 %v1232
        %1592 = vmatpush1.bf16.msra.mxu0 %v1231
        %1593 = vmatprep.subr.bf16.mxu0 %v1228
        %1594 = vmatpush1.bf16.msra.mxu0 %v1227
        %1595 = vmatprep.subr.bf16.mxu0 %v1224
        %1596 = vmatpush1.bf16.msra.mxu0 %v1223
        %1597 = vmatprep.subr.bf16.mxu0 %v1220
        %1598 = vmatpush1.bf16.msra.mxu0 %v1219
        %1599 = vmatprep.subr.bf16.mxu0 %v1216
        %1600 = vmatpush1.bf16.msra.mxu0 %v1215
        %1601 = vmatprep.subr.bf16.mxu0 %v1212
        %1602 = vmatpush1.bf16.msra.mxu0 %v1211
        %1603 = vmatprep.subr.bf16.mxu0 %v1208
        %1604 = vmatpush1.bf16.msra.mxu0 %v1207
        %1605 = vmatprep.subr.bf16.mxu0 %v1204
        %1606 = vmatpush1.bf16.msra.mxu0 %v1203
        %1607 = vmatprep.subr.bf16.mxu0 %v1264
        %1608 = vmatpush2.bf16.msra.mxu0 %v1263
        %1609 = vmatprep.subr.bf16.mxu0 %v1260
        %1610 = vmatpush2.bf16.msra.mxu0 %v1259
        %1611 = vmatprep.subr.bf16.mxu0 %v1256
        %1612 = vmatpush2.bf16.msra.mxu0 %v1255
        %1613 = vmatprep.subr.bf16.mxu0 %v1252
        %1614 = vmatpush2.bf16.msra.mxu0 %v1251
        %1615 = vmatprep.subr.bf16.mxu0 %v1248
        %1616 = vmatpush2.bf16.msra.mxu0 %v1247
        %1617 = vmatprep.subr.bf16.mxu0 %v1244
        %1618 = vmatpush2.bf16.msra.mxu0 %v1243
        %1619 = vmatprep.subr.bf16.mxu0 %v1240
        %1620 = vmatpush2.bf16.msra.mxu0 %v1239
        %1621 = vmatprep.subr.bf16.mxu0 %v1236
        %1622 = vmatpush2.bf16.msra.mxu0 %v1235
        %1623 = vmatprep.mubr.bf16.mxu0 %v322
        %1624 = vmatmul.mubr.bf16.gmra.mxu0 %v321
        %v1625 = vpop.f32.mrf.mxu0
        %v1626 = vadd.f32 %v1573, %v1625
        %v1627 = vpop.f32.mrf.mxu0
        %v1628 = vadd.f32 %v1575, %v1627
        %v1629 = vpop.f32.mrf.mxu0
        %v1630 = vadd.f32 %v1577, %v1629
        %v1631 = vpop.f32.mrf.mxu0
        %v1632 = vadd.f32 %v1579, %v1631
        %1633 = vmatprep.mubr.bf16.mxu0 %v329
        %1634 = vmatmul.mubr.bf16.gmra.mxu0 %v328
        %v1635 = vpop.f32.mrf.mxu0
        %v1636 = vadd.f32 %v1583, %v1635
        %v1637 = vpop.f32.mrf.mxu0
        %v1638 = vadd.f32 %v1585, %v1637
        %v1639 = vpop.f32.mrf.mxu0
        %v1640 = vadd.f32 %v1587, %v1639
        %v1641 = vpop.f32.mrf.mxu0
        %v1642 = vadd.f32 %v1589, %v1641
        %1643 = vdwg.mxu0
        %1644 = vmatprep.subr.bf16.mxu0 %v1296
        %1645 = vmatpush1.bf16.msra.mxu0 %v1295
        %1646 = vmatprep.subr.bf16.mxu0 %v1292
        %1647 = vmatpush1.bf16.msra.mxu0 %v1291
        %1648 = vmatprep.subr.bf16.mxu0 %v1288
        %1649 = vmatpush1.bf16.msra.mxu0 %v1287
        %1650 = vmatprep.subr.bf16.mxu0 %v1284
        %1651 = vmatpush1.bf16.msra.mxu0 %v1283
        %1652 = vmatprep.subr.bf16.mxu0 %v1280
        %1653 = vmatpush1.bf16.msra.mxu0 %v1279
        %1654 = vmatprep.subr.bf16.mxu0 %v1276
        %1655 = vmatpush1.bf16.msra.mxu0 %v1275
        %1656 = vmatprep.subr.bf16.mxu0 %v1272
        %1657 = vmatpush1.bf16.msra.mxu0 %v1271
        %1658 = vmatprep.subr.bf16.mxu0 %v1268
        %1659 = vmatpush1.bf16.msra.mxu0 %v1267
        %1660 = vmatprep.subr.bf16.mxu0 %v1328
        %1661 = vmatpush2.bf16.msra.mxu0 %v1327
        %1662 = vmatprep.subr.bf16.mxu0 %v1324
        %1663 = vmatpush2.bf16.msra.mxu0 %v1323
        %1664 = vmatprep.subr.bf16.mxu0 %v1320
        %1665 = vmatpush2.bf16.msra.mxu0 %v1319
        %1666 = vmatprep.subr.bf16.mxu0 %v1316
        %1667 = vmatpush2.bf16.msra.mxu0 %v1315
        %1668 = vmatprep.subr.bf16.mxu0 %v1312
        %1669 = vmatpush2.bf16.msra.mxu0 %v1311
        %1670 = vmatprep.subr.bf16.mxu0 %v1308
        %1671 = vmatpush2.bf16.msra.mxu0 %v1307
        %1672 = vmatprep.subr.bf16.mxu0 %v1304
        %1673 = vmatpush2.bf16.msra.mxu0 %v1303
        %1674 = vmatprep.subr.bf16.mxu0 %v1300
        %1675 = vmatpush2.bf16.msra.mxu0 %v1299
        %1676 = vmatprep.mubr.bf16.mxu0 %v324
        %1677 = vmatmul.mubr.bf16.gmra.mxu0 %v323
        %v1678 = vpop.f32.mrf.mxu0
        %v1679 = vadd.f32 %v1626, %v1678
        %v1680 = vpop.f32.mrf.mxu0
        %v1681 = vadd.f32 %v1628, %v1680
        %v1682 = vpop.f32.mrf.mxu0
        %v1683 = vadd.f32 %v1630, %v1682
        %v1684 = vpop.f32.mrf.mxu0
        %v1685 = vadd.f32 %v1632, %v1684
        %1686 = vmatprep.mubr.bf16.mxu0 %v331
        %1687 = vmatmul.mubr.bf16.gmra.mxu0 %v330
        %v1688 = vpop.f32.mrf.mxu0
        %v1689 = vadd.f32 %v1636, %v1688
        %v1690 = vpop.f32.mrf.mxu0
        %v1691 = vadd.f32 %v1638, %v1690
        %v1692 = vpop.f32.mrf.mxu0
        %v1693 = vadd.f32 %v1640, %v1692
        %v1694 = vpop.f32.mrf.mxu0
        %v1695 = vadd.f32 %v1642, %v1694
        %1696 = vdwg.mxu0
        %1697 = vmatprep.subr.bf16.mxu0 0
        %1698 = vmatpush1.bf16.msra.mxu0 0
        %1699 = vmatprep.subr.bf16.mxu0 0
        %1700 = vmatpush1.bf16.msra.mxu0 0
        %1701 = vmatprep.subr.bf16.mxu0 0
        %1702 = vmatpush1.bf16.msra.mxu0 0
        %1703 = vmatprep.subr.bf16.mxu0 0
        %1704 = vmatpush1.bf16.msra.mxu0 0
        %1705 = vmatprep.subr.bf16.mxu0 0
        %1706 = vmatpush1.bf16.msra.mxu0 0
        %1707 = vmatprep.subr.bf16.mxu0 0
        %1708 = vmatpush1.bf16.msra.mxu0 0
        %1709 = vmatprep.subr.bf16.mxu0 0
        %1710 = vmatpush1.bf16.msra.mxu0 0
        %1711 = vmatprep.subr.bf16.mxu0 %v1332
        %1712 = vmatpush1.bf16.msra.mxu0 %v1331
        %1713 = vmatprep.subr.bf16.mxu0 0
        %1714 = vmatpush2.bf16.msra.mxu0 0
        %1715 = vmatprep.subr.bf16.mxu0 0
        %1716 = vmatpush2.bf16.msra.mxu0 0
        %1717 = vmatprep.subr.bf16.mxu0 0
        %1718 = vmatpush2.bf16.msra.mxu0 0
        %1719 = vmatprep.subr.bf16.mxu0 0
        %1720 = vmatpush2.bf16.msra.mxu0 0
        %1721 = vmatprep.subr.bf16.mxu0 0
        %1722 = vmatpush2.bf16.msra.mxu0 0
        %1723 = vmatprep.subr.bf16.mxu0 0
        %1724 = vmatpush2.bf16.msra.mxu0 0
        %1725 = vmatprep.subr.bf16.mxu0 0
        %1726 = vmatpush2.bf16.msra.mxu0 0
        %1727 = vmatprep.subr.bf16.mxu0 0
        %1728 = vmatpush2.bf16.msra.mxu0 0
        %1729 = vmatprep.mubr.bf16.mxu0 0
        %1730 = vmatmul.mubr.bf16.gmra.mxu0 %v1533
        %v1731 = vpop.f32.mrf.mxu0
        %v1732 = vadd.f32 %v1679, %v1731
        %v1733 = vpop.f32.mrf.mxu0
        %v1734 = vadd.f32 %v1681, %v1733
        %v1735 = vpop.f32.mrf.mxu0
        %v1736 = vadd.f32 %v1683, %v1735
        %v1737 = vpop.f32.mrf.mxu0
        %v1738 = vadd.f32 %v1685, %v1737
        %1739 = vmatprep.mubr.bf16.mxu0 0
        %1740 = vmatmul.mubr.bf16.gmra.mxu0 %v1536
        %v1741 = vpop.f32.mrf.mxu0
        %v1742 = vadd.f32 %v1689, %v1741
        %v1743 = vpop.f32.mrf.mxu0
        %v1744 = vadd.f32 %v1691, %v1743
        %v1745 = vpop.f32.mrf.mxu0
        %v1746 = vadd.f32 %v1693, %v1745
        %v1747 = vpop.f32.mrf.mxu0
        %v1748 = vadd.f32 %v1695, %v1747
        %1749 = vdwg.mxu0
        %1750 = vmatprep.subr.bf16.mxu0 %v1170
        %1751 = vmatpush1.bf16.msra.mxu0 %v1169
        %1752 = vmatprep.subr.bf16.mxu0 %v1166
        %1753 = vmatpush1.bf16.msra.mxu0 %v1165
        %1754 = vmatprep.subr.bf16.mxu0 %v1162
        %1755 = vmatpush1.bf16.msra.mxu0 %v1161
        %1756 = vmatprep.subr.bf16.mxu0 %v1158
        %1757 = vmatpush1.bf16.msra.mxu0 %v1157
        %1758 = vmatprep.subr.bf16.mxu0 %v1154
        %1759 = vmatpush1.bf16.msra.mxu0 %v1153
        %1760 = vmatprep.subr.bf16.mxu0 %v1150
        %1761 = vmatpush1.bf16.msra.mxu0 %v1149
        %1762 = vmatprep.subr.bf16.mxu0 %v1146
        %1763 = vmatpush1.bf16.msra.mxu0 %v1145
        %1764 = vmatprep.subr.bf16.mxu0 %v1142
        %1765 = vmatpush1.bf16.msra.mxu0 %v1141
        %1766 = vmatprep.subr.bf16.mxu0 %v1202
        %1767 = vmatpush2.bf16.msra.mxu0 %v1201
        %1768 = vmatprep.subr.bf16.mxu0 %v1198
        %1769 = vmatpush2.bf16.msra.mxu0 %v1197
        %1770 = vmatprep.subr.bf16.mxu0 %v1194
        %1771 = vmatpush2.bf16.msra.mxu0 %v1193
        %1772 = vmatprep.subr.bf16.mxu0 %v1190
        %1773 = vmatpush2.bf16.msra.mxu0 %v1189
        %1774 = vmatprep.subr.bf16.mxu0 %v1186
        %1775 = vmatpush2.bf16.msra.mxu0 %v1185
        %1776 = vmatprep.subr.bf16.mxu0 %v1182
        %1777 = vmatpush2.bf16.msra.mxu0 %v1181
        %1778 = vmatprep.subr.bf16.mxu0 %v1178
        %1779 = vmatpush2.bf16.msra.mxu0 %v1177
        %1780 = vmatprep.subr.bf16.mxu0 %v1174
        %1781 = vmatpush2.bf16.msra.mxu0 %v1173
        %1782 = vmatprep.mubr.bf16.mxu0 %v320
        %1783 = vmatmul.mubr.bf16.gmra.mxu0 %v319
        %v1784 = vpop.f32.mrf.mxu0
        %v1785 = vadd.f32 %v542, %v1784
        %v1786 = vpop.f32.mrf.mxu0
        %v1787 = vadd.f32 %v546, %v1786
        %v1788 = vpop.f32.mrf.mxu0
        %v1789 = vadd.f32 %v542, %v1788
        %v1790 = vpop.f32.mrf.mxu0
        %v1791 = vadd.f32 %v546, %v1790
        %1792 = vmatprep.mubr.bf16.mxu0 %v327
        %1793 = vmatmul.mubr.bf16.gmra.mxu0 %v326
        %v1794 = vpop.f32.mrf.mxu0
        %v1795 = vadd.f32 %v542, %v1794
        %v1796 = vpop.f32.mrf.mxu0
        %v1797 = vadd.f32 %v546, %v1796
        %v1798 = vpop.f32.mrf.mxu0
        %v1799 = vadd.f32 %v542, %v1798
        %v1800 = vpop.f32.mrf.mxu0
        %v1801 = vadd.f32 %v546, %v1800
        %1802 = vdwg.mxu0
        %1803 = vmatprep.subr.bf16.mxu0 %v1234
        %1804 = vmatpush1.bf16.msra.mxu0 %v1233
        %1805 = vmatprep.subr.bf16.mxu0 %v1230
        %1806 = vmatpush1.bf16.msra.mxu0 %v1229
        %1807 = vmatprep.subr.bf16.mxu0 %v1226
        %1808 = vmatpush1.bf16.msra.mxu0 %v1225
        %1809 = vmatprep.subr.bf16.mxu0 %v1222
        %1810 = vmatpush1.bf16.msra.mxu0 %v1221
        %1811 = vmatprep.subr.bf16.mxu0 %v1218
        %1812 = vmatpush1.bf16.msra.mxu0 %v1217
        %1813 = vmatprep.subr.bf16.mxu0 %v1214
        %1814 = vmatpush1.bf16.msra.mxu0 %v1213
        %1815 = vmatprep.subr.bf16.mxu0 %v1210
        %1816 = vmatpush1.bf16.msra.mxu0 %v1209
        %1817 = vmatprep.subr.bf16.mxu0 %v1206
        %1818 = vmatpush1.bf16.msra.mxu0 %v1205
        %1819 = vmatprep.subr.bf16.mxu0 %v1266
        %1820 = vmatpush2.bf16.msra.mxu0 %v1265
        %1821 = vmatprep.subr.bf16.mxu0 %v1262
        %1822 = vmatpush2.bf16.msra.mxu0 %v1261
        %1823 = vmatprep.subr.bf16.mxu0 %v1258
        %1824 = vmatpush2.bf16.msra.mxu0 %v1257
        %1825 = vmatprep.subr.bf16.mxu0 %v1254
        %1826 = vmatpush2.bf16.msra.mxu0 %v1253
        %1827 = vmatprep.subr.bf16.mxu0 %v1250
        %1828 = vmatpush2.bf16.msra.mxu0 %v1249
        %1829 = vmatprep.subr.bf16.mxu0 %v1246
        %1830 = vmatpush2.bf16.msra.mxu0 %v1245
        %1831 = vmatprep.subr.bf16.mxu0 %v1242
        %1832 = vmatpush2.bf16.msra.mxu0 %v1241
        %1833 = vmatprep.subr.bf16.mxu0 %v1238
        %1834 = vmatpush2.bf16.msra.mxu0 %v1237
        %1835 = vmatprep.mubr.bf16.mxu0 %v322
        %1836 = vmatmul.mubr.bf16.gmra.mxu0 %v321
        %v1837 = vpop.f32.mrf.mxu0
        %v1838 = vadd.f32 %v1785, %v1837
        %v1839 = vpop.f32.mrf.mxu0
        %v1840 = vadd.f32 %v1787, %v1839
        %v1841 = vpop.f32.mrf.mxu0
        %v1842 = vadd.f32 %v1789, %v1841
        %v1843 = vpop.f32.mrf.mxu0
        %v1844 = vadd.f32 %v1791, %v1843
        %1845 = vmatprep.mubr.bf16.mxu0 %v329
        %1846 = vmatmul.mubr.bf16.gmra.mxu0 %v328
        %v1847 = vpop.f32.mrf.mxu0
        %v1848 = vadd.f32 %v1795, %v1847
        %v1849 = vpop.f32.mrf.mxu0
        %v1850 = vadd.f32 %v1797, %v1849
        %v1851 = vpop.f32.mrf.mxu0
        %v1852 = vadd.f32 %v1799, %v1851
        %v1853 = vpop.f32.mrf.mxu0
        %v1854 = vadd.f32 %v1801, %v1853
        %1855 = vdwg.mxu0
        %1856 = vmatprep.subr.bf16.mxu0 %v1298
        %1857 = vmatpush1.bf16.msra.mxu0 %v1297
        %1858 = vmatprep.subr.bf16.mxu0 %v1294
        %1859 = vmatpush1.bf16.msra.mxu0 %v1293
        %1860 = vmatprep.subr.bf16.mxu0 %v1290
        %1861 = vmatpush1.bf16.msra.mxu0 %v1289
        %1862 = vmatprep.subr.bf16.mxu0 %v1286
        %1863 = vmatpush1.bf16.msra.mxu0 %v1285
        %1864 = vmatprep.subr.bf16.mxu0 %v1282
        %1865 = vmatpush1.bf16.msra.mxu0 %v1281
        %1866 = vmatprep.subr.bf16.mxu0 %v1278
        %1867 = vmatpush1.bf16.msra.mxu0 %v1277
        %1868 = vmatprep.subr.bf16.mxu0 %v1274
        %1869 = vmatpush1.bf16.msra.mxu0 %v1273
        %1870 = vmatprep.subr.bf16.mxu0 %v1270
        %1871 = vmatpush1.bf16.msra.mxu0 %v1269
        %1872 = vmatprep.subr.bf16.mxu0 %v1330
        %1873 = vmatpush2.bf16.msra.mxu0 %v1329
        %1874 = vmatprep.subr.bf16.mxu0 %v1326
        %1875 = vmatpush2.bf16.msra.mxu0 %v1325
        %1876 = vmatprep.subr.bf16.mxu0 %v1322
        %1877 = vmatpush2.bf16.msra.mxu0 %v1321
        %1878 = vmatprep.subr.bf16.mxu0 %v1318
        %1879 = vmatpush2.bf16.msra.mxu0 %v1317
        %1880 = vmatprep.subr.bf16.mxu0 %v1314
        %1881 = vmatpush2.bf16.msra.mxu0 %v1313
        %1882 = vmatprep.subr.bf16.mxu0 %v1310
        %1883 = vmatpush2.bf16.msra.mxu0 %v1309
        %1884 = vmatprep.subr.bf16.mxu0 %v1306
        %1885 = vmatpush2.bf16.msra.mxu0 %v1305
        %1886 = vmatprep.subr.bf16.mxu0 %v1302
        %1887 = vmatpush2.bf16.msra.mxu0 %v1301
        %1888 = vmatprep.mubr.bf16.mxu0 %v324
        %1889 = vmatmul.mubr.bf16.gmra.mxu0 %v323
        %v1890 = vpop.f32.mrf.mxu0
        %v1891 = vadd.f32 %v1838, %v1890
        %v1892 = vpop.f32.mrf.mxu0
        %v1893 = vadd.f32 %v1840, %v1892
        %v1894 = vpop.f32.mrf.mxu0
        %v1895 = vadd.f32 %v1842, %v1894
        %v1896 = vpop.f32.mrf.mxu0
        %v1897 = vadd.f32 %v1844, %v1896
        %1898 = vmatprep.mubr.bf16.mxu0 %v331
        %1899 = vmatmul.mubr.bf16.gmra.mxu0 %v330
        %v1900 = vpop.f32.mrf.mxu0
        %v1901 = vadd.f32 %v1848, %v1900
        %v1902 = vpop.f32.mrf.mxu0
        %v1903 = vadd.f32 %v1850, %v1902
        %v1904 = vpop.f32.mrf.mxu0
        %v1905 = vadd.f32 %v1852, %v1904
        %v1906 = vpop.f32.mrf.mxu0
        %v1907 = vadd.f32 %v1854, %v1906
        %1908 = vdwg.mxu0
        %1909 = vmatprep.subr.bf16.mxu0 0
        %1910 = vmatpush1.bf16.msra.mxu0 0
        %1911 = vmatprep.subr.bf16.mxu0 0
        %1912 = vmatpush1.bf16.msra.mxu0 0
        %1913 = vmatprep.subr.bf16.mxu0 0
        %1914 = vmatpush1.bf16.msra.mxu0 0
        %1915 = vmatprep.subr.bf16.mxu0 0
        %1916 = vmatpush1.bf16.msra.mxu0 0
        %1917 = vmatprep.subr.bf16.mxu0 0
        %1918 = vmatpush1.bf16.msra.mxu0 0
        %1919 = vmatprep.subr.bf16.mxu0 0
        %1920 = vmatpush1.bf16.msra.mxu0 0
        %1921 = vmatprep.subr.bf16.mxu0 0
        %1922 = vmatpush1.bf16.msra.mxu0 0
        %1923 = vmatprep.subr.bf16.mxu0 %v1334
        %1924 = vmatpush1.bf16.msra.mxu0 %v1333
        %1925 = vmatprep.subr.bf16.mxu0 0
        %1926 = vmatpush2.bf16.msra.mxu0 0
        %1927 = vmatprep.subr.bf16.mxu0 0
        %1928 = vmatpush2.bf16.msra.mxu0 0
        %1929 = vmatprep.subr.bf16.mxu0 0
        %1930 = vmatpush2.bf16.msra.mxu0 0
        %1931 = vmatprep.subr.bf16.mxu0 0
        %1932 = vmatpush2.bf16.msra.mxu0 0
        %1933 = vmatprep.subr.bf16.mxu0 0
        %1934 = vmatpush2.bf16.msra.mxu0 0
        %1935 = vmatprep.subr.bf16.mxu0 0
        %1936 = vmatpush2.bf16.msra.mxu0 0
        %1937 = vmatprep.subr.bf16.mxu0 0
        %1938 = vmatpush2.bf16.msra.mxu0 0
        %1939 = vmatprep.subr.bf16.mxu0 0
        %1940 = vmatpush2.bf16.msra.mxu0 0
        %1941 = vmatprep.mubr.bf16.mxu0 0
        %1942 = vmatmul.mubr.bf16.gmra.mxu0 %v1533
        %v1943 = vpop.f32.mrf.mxu0
        %v1944 = vadd.f32 %v1891, %v1943
        %v1945 = vpop.f32.mrf.mxu0
        %v1946 = vadd.f32 %v1893, %v1945
        %v1947 = vpop.f32.mrf.mxu0
        %v1948 = vadd.f32 %v1895, %v1947
        %v1949 = vpop.f32.mrf.mxu0
        %v1950 = vadd.f32 %v1897, %v1949
        %1951 = vmatprep.mubr.bf16.mxu0 0
        %1952 = vmatmul.mubr.bf16.gmra.mxu0 %v1536
        %v1953 = vpop.f32.mrf.mxu0
        %v1954 = vadd.f32 %v1901, %v1953
        %v1955 = vpop.f32.mrf.mxu0
        %v1956 = vadd.f32 %v1903, %v1955
        %v1957 = vpop.f32.mrf.mxu0
        %v1958 = vadd.f32 %v1905, %v1957
        %v1959 = vpop.f32.mrf.mxu0
        %v1960 = vadd.f32 %v1907, %v1959
        %1961 = vdwg.mxu0
        %v1962 = vmax.f32 %v1732, 0.0
        %v1963 = vmax.f32 %v1734, 0.0
        %v1964 = vmax.f32 %v1944, 0.0
        %v1965 = vmax.f32 %v1946, 0.0
        %v1966 = vmax.f32 %v1736, 0.0
        %v1967 = vmax.f32 %v1738, 0.0
        %v1968 = vmax.f32 %v1948, 0.0
        %v1969 = vmax.f32 %v1950, 0.0
        %v1970 = vmax.f32 %v1742, 0.0
        %v1971 = vmax.f32 %v1744, 0.0
        %v1972 = vmax.f32 %v1954, 0.0
        %v1973 = vmax.f32 %v1956, 0.0
        %v1974 = vmax.f32 %v1746, 0.0
        %v1975 = vmax.f32 %v1748, 0.0
        %v1976 = vmax.f32 %v1958, 0.0
        %v1977 = vmax.f32 %v1960, 0.0
        %v1978 = vpack.c.bf16 %v1966, %v1962
        %v1979 = vpack.c.bf16 %v1967, %v1963
        %v1980 = vpack.c.bf16 %v1968, %v1964
        %v1981 = vpack.c.bf16 %v1969, %v1965
        %v1982 = vpack.c.bf16 %v1974, %v1970
        %v1983 = vpack.c.bf16 %v1975, %v1971
        %v1984 = vpack.c.bf16 %v1976, %v1972
        %v1985 = vpack.c.bf16 %v1977, %v1973
        %v1986 = vld [vmem:[#allocation7] sm:$0xf]
        %v1987 = vld [vmem:[#allocation7 + $0x4] sm:$0xf]
        %v1988 = vld [vmem:[#allocation7 + $0x8] sm:$0xf]
        %v1989 = vld [vmem:[#allocation7 + $0xc] sm:$0xf]
        %v1990 = vld [vmem:[#allocation7 + $0x10] sm:$0xf]
        %v1991 = vld [vmem:[#allocation7 + $0x14] sm:$0xf]
        %v1992 = vld [vmem:[#allocation7 + $0x18] sm:$0xf]
        %v1993 = vld [vmem:[#allocation7 + $0x1c] sm:$0xf]
        %v1994 = vld [vmem:[#allocation7 + $0x20] sm:$0xf]
        %v1995 = vld [vmem:[#allocation7 + $0x24] sm:$0xf]
        %v1996 = vld [vmem:[#allocation7 + $0x28] sm:$0xf]
        %v1997 = vld [vmem:[#allocation7 + $0x2c] sm:$0xf]
        %v1998 = vld [vmem:[#allocation7 + $0x30] sm:$0xf]
        %v1999 = vld [vmem:[#allocation7 + $0x34] sm:$0xf]
        %v2000 = vld [vmem:[#allocation7 + $0x38] sm:$0xf]
        %v2001 = vld [vmem:[#allocation7 + $0x3c] sm:$0xf]
        %v2002 = vld [vmem:[#allocation7 + $0x40] sm:$0xf]
        %v2003 = vld [vmem:[#allocation7 + $0x44] sm:$0xf]
        %v2004 = vld [vmem:[#allocation7 + $0x48] sm:$0xf]
        %v2005 = vld [vmem:[#allocation7 + $0x4c] sm:$0xf]
        %v2006 = vld [vmem:[#allocation7 + $0x50] sm:$0xf]
        %v2007 = vld [vmem:[#allocation7 + $0x54] sm:$0xf]
        %v2008 = vld [vmem:[#allocation7 + $0x58] sm:$0xf]
        %v2009 = vld [vmem:[#allocation7 + $0x5c] sm:$0xf]
        %v2010 = vld [vmem:[#allocation7 + $0x60] sm:$0xf]
        %v2011 = vld [vmem:[#allocation7 + $0x64] sm:$0xf]
        %v2012 = vld [vmem:[#allocation7 + $0x68] sm:$0xf]
        %v2013 = vld [vmem:[#allocation7 + $0x6c] sm:$0xf]
        %v2014 = vld [vmem:[#allocation7 + $0x70] sm:$0xf]
        %v2015 = vld [vmem:[#allocation7 + $0x74] sm:$0xf]
        %v2016 = vld [vmem:[#allocation7 + $0x78] sm:$0xf]
        %v2017 = vld [vmem:[#allocation7 + $0x7c] sm:$0xf]
        %v2018 = vld [vmem:[#allocation7 + $0x80] sm:$0xf]
        %v2019 = vld [vmem:[#allocation7 + $0x84] sm:$0xf]
        %v2020 = vld [vmem:[#allocation7 + $0x88] sm:$0xf]
        %v2021 = vld [vmem:[#allocation7 + $0x8c] sm:$0xf]
        %v2022 = vld [vmem:[#allocation7 + $0x90] sm:$0xf]
        %v2023 = vld [vmem:[#allocation7 + $0x94] sm:$0xf]
        %v2024 = vld [vmem:[#allocation7 + $0x98] sm:$0xf]
        %v2025 = vld [vmem:[#allocation7 + $0x9c] sm:$0xf]
        %v2026 = vld [vmem:[#allocation7 + $0xa0] sm:$0xf]
        %v2027 = vld [vmem:[#allocation7 + $0xa4] sm:$0xf]
        %v2028 = vld [vmem:[#allocation7 + $0xa8] sm:$0xf]
        %v2029 = vld [vmem:[#allocation7 + $0xac] sm:$0xf]
        %v2030 = vld [vmem:[#allocation7 + $0xb0] sm:$0xf]
        %v2031 = vld [vmem:[#allocation7 + $0xb4] sm:$0xf]
        %v2032 = vld [vmem:[#allocation7 + $0xb8] sm:$0xf]
        %v2033 = vld [vmem:[#allocation7 + $0xbc] sm:$0xf]
        %v2034 = vld [vmem:[#allocation7 + $0xc0] sm:$0xf]
        %v2035 = vld [vmem:[#allocation7 + $0xc4] sm:$0xf]
        %v2036 = vld [vmem:[#allocation7 + $0xc8] sm:$0xf]
        %v2037 = vld [vmem:[#allocation7 + $0xcc] sm:$0xf]
        %v2038 = vld [vmem:[#allocation7 + $0xd0] sm:$0xf]
        %v2039 = vld [vmem:[#allocation7 + $0xd4] sm:$0xf]
        %v2040 = vld [vmem:[#allocation7 + $0xd8] sm:$0xf]
        %v2041 = vld [vmem:[#allocation7 + $0xdc] sm:$0xf]
        %v2042 = vld [vmem:[#allocation7 + $0xe0] sm:$0xf]
        %v2043 = vld [vmem:[#allocation7 + $0xe4] sm:$0xf]
        %v2044 = vld [vmem:[#allocation7 + $0xe8] sm:$0xf]
        %v2045 = vld [vmem:[#allocation7 + $0xec] sm:$0xf]
        %v2046 = vld [vmem:[#allocation7 + $0xf0] sm:$0xf]
        %v2047 = vld [vmem:[#allocation7 + $0xf4] sm:$0xf]
        %v2048 = vld [vmem:[#allocation7 + $0xf8] sm:$0xf]
        %v2049 = vld [vmem:[#allocation7 + $0xfc] sm:$0xf]
        %v2050 = vld [vmem:[%s4] sm:$0x1]
        %v2052 = vlaneseq
        %v2053 = vshrl.u32 %v2052, 7
        %v2054 = vsub.s32 0, %v2053
        %v2055 = vrot.slane %v2050, %v2054
        %v2121 = vunpack.c.l.b16 %v1986
        %v2122 = vunpack.c.l.b16 %v1987
        %v2123 = vunpack.c.l.b16 %v1988
        %v2124 = vunpack.c.l.b16 %v1989
        %v2125 = vunpack.c.l.b16 %v1990
        %v2126 = vunpack.c.l.b16 %v1991
        %v2127 = vunpack.c.l.b16 %v1992
        %v2128 = vunpack.c.l.b16 %v1993
        %v2129 = vunpack.c.l.b16 %v1994
        %v2130 = vunpack.c.l.b16 %v1995
        %v2131 = vunpack.c.l.b16 %v1996
        %v2132 = vunpack.c.l.b16 %v1997
        %v2133 = vunpack.c.l.b16 %v1998
        %v2134 = vunpack.c.l.b16 %v1999
        %v2135 = vunpack.c.l.b16 %v2000
        %v2136 = vunpack.c.l.b16 %v2001
        %v2137 = vunpack.c.l.b16 %v2002
        %v2138 = vunpack.c.l.b16 %v2003
        %v2139 = vunpack.c.l.b16 %v2004
        %v2140 = vunpack.c.l.b16 %v2005
        %v2141 = vunpack.c.l.b16 %v2006
        %v2142 = vunpack.c.l.b16 %v2007
        %v2143 = vunpack.c.l.b16 %v2008
        %v2144 = vunpack.c.l.b16 %v2009
        %v2145 = vunpack.c.l.b16 %v2010
        %v2146 = vunpack.c.l.b16 %v2011
        %v2147 = vunpack.c.l.b16 %v2012
        %v2148 = vunpack.c.l.b16 %v2013
        %v2149 = vunpack.c.l.b16 %v2014
        %v2150 = vunpack.c.l.b16 %v2015
        %v2151 = vunpack.c.l.b16 %v2016
        %v2152 = vunpack.c.l.b16 %v2017
        %v2153 = vunpack.c.l.b16 %v2018
        %v2154 = vunpack.c.l.b16 %v2019
        %v2155 = vunpack.c.l.b16 %v2020
        %v2156 = vunpack.c.l.b16 %v2021
        %v2157 = vunpack.c.l.b16 %v2022
        %v2158 = vunpack.c.l.b16 %v2023
        %v2159 = vunpack.c.l.b16 %v2024
        %v2160 = vunpack.c.l.b16 %v2025
        %v2161 = vunpack.c.l.b16 %v2026
        %v2162 = vunpack.c.l.b16 %v2027
        %v2163 = vunpack.c.l.b16 %v2028
        %v2164 = vunpack.c.l.b16 %v2029
        %v2165 = vunpack.c.l.b16 %v2030
        %v2166 = vunpack.c.l.b16 %v2031
        %v2167 = vunpack.c.l.b16 %v2032
        %v2168 = vunpack.c.l.b16 %v2033
        %v2169 = vunpack.c.l.b16 %v2034
        %v2170 = vunpack.c.l.b16 %v2035
        %v2171 = vunpack.c.l.b16 %v2036
        %v2172 = vunpack.c.l.b16 %v2037
        %v2173 = vunpack.c.l.b16 %v2038
        %v2174 = vunpack.c.l.b16 %v2039
        %v2175 = vunpack.c.l.b16 %v2040
        %v2176 = vunpack.c.l.b16 %v2041
        %v2177 = vunpack.c.l.b16 %v2042
        %v2178 = vunpack.c.l.b16 %v2043
        %v2179 = vunpack.c.l.b16 %v2044
        %v2180 = vunpack.c.l.b16 %v2045
        %v2181 = vunpack.c.l.b16 %v2046
        %v2182 = vunpack.c.l.b16 %v2047
        %v2183 = vunpack.c.l.b16 %v2048
        %v2184 = vunpack.c.l.b16 %v2049
        %v2185 = vpack.c.b16 %v2122, %v2121
        %v2186 = vpack.c.b16 %v2124, %v2123
        %v2187 = vpack.c.b16 %v2126, %v2125
        %v2188 = vpack.c.b16 %v2128, %v2127
        %v2189 = vpack.c.b16 %v2130, %v2129
        %v2190 = vpack.c.b16 %v2132, %v2131
        %v2191 = vpack.c.b16 %v2134, %v2133
        %v2192 = vpack.c.b16 %v2136, %v2135
        %v2193 = vpack.c.b16 %v2138, %v2137
        %v2194 = vpack.c.b16 %v2140, %v2139
        %v2195 = vpack.c.b16 %v2142, %v2141
        %v2196 = vpack.c.b16 %v2144, %v2143
        %v2197 = vpack.c.b16 %v2146, %v2145
        %v2198 = vpack.c.b16 %v2148, %v2147
        %v2199 = vpack.c.b16 %v2150, %v2149
        %v2200 = vpack.c.b16 %v2152, %v2151
        %v2201 = vpack.c.b16 %v2154, %v2153
        %v2202 = vpack.c.b16 %v2156, %v2155
        %v2203 = vpack.c.b16 %v2158, %v2157
        %v2204 = vpack.c.b16 %v2160, %v2159
        %v2205 = vpack.c.b16 %v2162, %v2161
        %v2206 = vpack.c.b16 %v2164, %v2163
        %v2207 = vpack.c.b16 %v2166, %v2165
        %v2208 = vpack.c.b16 %v2168, %v2167
        %v2209 = vpack.c.b16 %v2170, %v2169
        %v2210 = vpack.c.b16 %v2172, %v2171
        %v2211 = vpack.c.b16 %v2174, %v2173
        %v2212 = vpack.c.b16 %v2176, %v2175
        %v2213 = vpack.c.b16 %v2178, %v2177
        %v2214 = vpack.c.b16 %v2180, %v2179
        %v2215 = vpack.c.b16 %v2182, %v2181
        %v2216 = vpack.c.b16 %v2184, %v2183
        %2249 = vmatprep.subr.bf16.mxu0 0
        %2250 = vmatpush1.bf16.msra.mxu0 %v2192
        %2251 = vmatprep.subr.bf16.mxu0 0
        %2252 = vmatpush1.bf16.msra.mxu0 %v2191
        %2253 = vmatprep.subr.bf16.mxu0 0
        %2254 = vmatpush1.bf16.msra.mxu0 %v2190
        %2255 = vmatprep.subr.bf16.mxu0 0
        %2256 = vmatpush1.bf16.msra.mxu0 %v2189
        %2257 = vmatprep.subr.bf16.mxu0 0
        %2258 = vmatpush1.bf16.msra.mxu0 %v2188
        %2259 = vmatprep.subr.bf16.mxu0 0
        %2260 = vmatpush1.bf16.msra.mxu0 %v2187
        %2261 = vmatprep.subr.bf16.mxu0 0
        %2262 = vmatpush1.bf16.msra.mxu0 %v2186
        %2263 = vmatprep.subr.bf16.mxu0 0
        %2264 = vmatpush1.bf16.msra.mxu0 %v2185
        %2265 = vmatprep.subr.bf16.mxu0 0
        %2266 = vmatpush2.bf16.msra.mxu0 %v2200
        %2267 = vmatprep.subr.bf16.mxu0 0
        %2268 = vmatpush2.bf16.msra.mxu0 %v2199
        %2269 = vmatprep.subr.bf16.mxu0 0
        %2270 = vmatpush2.bf16.msra.mxu0 %v2198
        %2271 = vmatprep.subr.bf16.mxu0 0
        %2272 = vmatpush2.bf16.msra.mxu0 %v2197
        %2273 = vmatprep.subr.bf16.mxu0 0
        %2274 = vmatpush2.bf16.msra.mxu0 %v2196
        %2275 = vmatprep.subr.bf16.mxu0 0
        %2276 = vmatpush2.bf16.msra.mxu0 %v2195
        %2277 = vmatprep.subr.bf16.mxu0 0
        %2278 = vmatpush2.bf16.msra.mxu0 %v2194
        %2279 = vmatprep.subr.bf16.mxu0 0
        %2280 = vmatpush2.bf16.msra.mxu0 %v2193
        %2281 = vmatprep.mubr.bf16.mxu0 %v1979
        %2282 = vmatmul.mubr.bf16.gmra.mxu0 %v1978
        %v2283 = vpop.f32.mrf.mxu0
        %v2284 = vadd.f32 %v2055, %v2283
        %v2285 = vpop.f32.mrf.mxu0
        %v2286 = vpop.f32.mrf.mxu0
        %v2287 = vadd.f32 %v2055, %v2286
        %v2288 = vpop.f32.mrf.mxu0
        %2289 = vmatprep.mubr.bf16.mxu0 %v1983
        %2290 = vmatmul.mubr.bf16.gmra.mxu0 %v1982
        %v2291 = vpop.f32.mrf.mxu0
        %v2292 = vadd.f32 %v2055, %v2291
        %v2293 = vpop.f32.mrf.mxu0
        %v2294 = vpop.f32.mrf.mxu0
        %v2295 = vadd.f32 %v2055, %v2294
        %v2296 = vpop.f32.mrf.mxu0
        %2297 = vdwg.mxu0
        %2298 = vmatprep.subr.bf16.mxu0 0
        %2299 = vmatpush1.bf16.msra.mxu0 %v2208
        %2300 = vmatprep.subr.bf16.mxu0 0
        %2301 = vmatpush1.bf16.msra.mxu0 %v2207
        %2302 = vmatprep.subr.bf16.mxu0 0
        %2303 = vmatpush1.bf16.msra.mxu0 %v2206
        %2304 = vmatprep.subr.bf16.mxu0 0
        %2305 = vmatpush1.bf16.msra.mxu0 %v2205
        %2306 = vmatprep.subr.bf16.mxu0 0
        %2307 = vmatpush1.bf16.msra.mxu0 %v2204
        %2308 = vmatprep.subr.bf16.mxu0 0
        %2309 = vmatpush1.bf16.msra.mxu0 %v2203
        %2310 = vmatprep.subr.bf16.mxu0 0
        %2311 = vmatpush1.bf16.msra.mxu0 %v2202
        %2312 = vmatprep.subr.bf16.mxu0 0
        %2313 = vmatpush1.bf16.msra.mxu0 %v2201
        %2314 = vmatprep.subr.bf16.mxu0 0
        %2315 = vmatpush2.bf16.msra.mxu0 %v2216
        %2316 = vmatprep.subr.bf16.mxu0 0
        %2317 = vmatpush2.bf16.msra.mxu0 %v2215
        %2318 = vmatprep.subr.bf16.mxu0 0
        %2319 = vmatpush2.bf16.msra.mxu0 %v2214
        %2320 = vmatprep.subr.bf16.mxu0 0
        %2321 = vmatpush2.bf16.msra.mxu0 %v2213
        %2322 = vmatprep.subr.bf16.mxu0 0
        %2323 = vmatpush2.bf16.msra.mxu0 %v2212
        %2324 = vmatprep.subr.bf16.mxu0 0
        %2325 = vmatpush2.bf16.msra.mxu0 %v2211
        %2326 = vmatprep.subr.bf16.mxu0 0
        %2327 = vmatpush2.bf16.msra.mxu0 %v2210
        %2328 = vmatprep.subr.bf16.mxu0 0
        %2329 = vmatpush2.bf16.msra.mxu0 %v2209
        %2330 = vmatprep.mubr.bf16.mxu0 %v1981
        %2331 = vmatmul.mubr.bf16.gmra.mxu0 %v1980
        %v2332 = vpop.f32.mrf.mxu0
        %v2333 = vadd.f32 %v2284, %v2332
        %v2334 = vpop.f32.mrf.mxu0
        %v2335 = vpop.f32.mrf.mxu0
        %v2336 = vadd.f32 %v2287, %v2335
        %v2337 = vpop.f32.mrf.mxu0
        %2338 = vmatprep.mubr.bf16.mxu0 %v1985
        %2339 = vmatmul.mubr.bf16.gmra.mxu0 %v1984
        %v2340 = vpop.f32.mrf.mxu0
        %v2341 = vadd.f32 %v2292, %v2340
        %v2342 = vpop.f32.mrf.mxu0
        %v2343 = vpop.f32.mrf.mxu0
        %v2344 = vadd.f32 %v2295, %v2343
        %v2345 = vpop.f32.mrf.mxu0
        %2346 = vdwg.mxu0
        %v2347 = vpack.c.bf16 %v2336, %v2333
        %v2348 = vpack.c.bf16 %v2344, %v2341
        %v2351 = vunpack.c.l.b16 %v2347
        %v2352 = vunpack.c.h.b16 %v2347
        %v2353 = vunpack.c.l.b16 %v2348
        %v2354 = vunpack.c.h.b16 %v2348
        %v2355 = vpack.c.b16 %v2351, %v2351
        %v2356 = vpack.c.b16 %v2352, %v2352
        %v2357 = vpack.c.b16 %v2353, %v2353
        %v2358 = vpack.c.b16 %v2354, %v2354
        %2363 = vst [vmem:[%s288] sm:$0xf] %v2355
        %2364 = vst [vmem:[%s288 + $0x4] sm:$0xf] %v2356
        %2365 = vst [vmem:[%s288 + $0x8] sm:$0xf] %v2357
        %2366 = vst [vmem:[%s288 + $0xc] sm:$0xf] %v2358
        %s2367 = smul.u32 4, %s21
        %p2368 = scmp.lt.s32.totalorder %s2367, 7
        %s2369 = scalar_select %p2368, %s2367, 7
        %s2370 = smul.addr %s2369, 4
        %s2371 = scalar_lea.vmem %s5, %s2370
        // Predicated region
        $region57: #{ffnn_forward.1} parent=39 // pred_check
          %p2372 = pneg %p149
        $region58: #{ffnn_forward.1} parent=39 // pred_check_branch
          %2374 = sbr.rel (%p2372) target = $region60
        $region59: #{ffnn_forward.1} parent=39 // pred_region
          %s2375 = smul.u32 4, %s21
        $region60: #{ffnn_forward.1} parent=39 // pred_fallthru
          _
      $region40: #{ffnn_forward.1} parent=5 // pred_fallthru
        _
      %p2376 = scmp.le.s32.totalorder 2, %s16
      // Predicated region
      $region61: #{ffnn_forward.1} parent=5 // pred_check
        %p2377 = pneg %p2376
      $region62: #{ffnn_forward.1} parent=5 // pred_check_branch
        %2379 = sbr.rel (%p2377) target = $region64
      $region63: #{ffnn_forward.1} parent=5 // pred_region
        %s2380 = ssub.s32 %s16, 2
        // Predicated region
        $region65: #{ffnn_forward.1} parent=63 // pred_check
          %p2381 = pneg %p155
        $region66: #{ffnn_forward.1} parent=63 // pred_check_branch
          %2383 = sbr.rel (%p2381) target = $region68
        $region67: #{ffnn_forward.1} parent=63 // pred_region
          %s2384 = smul.u32 4, %s22
          %p2385 = scmp.lt.s32.totalorder %s2384, 7
          %s2386 = scalar_select %p2385, %s2384, 7
          %s2387 = smul.addr %s2386, 4
          %s2388 = scalar_lea.vmem %s5, %s2387
        $region68: #{ffnn_forward.1} parent=63 // pred_fallthru
          _
      $region64: #{ffnn_forward.1} parent=5 // pred_fallthru
        _
    $region6: #{ffnn_forward.1} parent=1 // loop_footer
      %s20 = sadd.s32 1, %s16
    $region7: #{ffnn_forward.1} parent=1 // loop_footer_branch
      %15 = sbr.rel target = $region3
    $region8: #{ffnn_forward.1} parent=1 // loop_exit
      _
    %2389 = vsyncpa [#allocation3], 1
    %s2390 = scalar_lea.sflag [#allocation3], 1
    %2391 = vsyncpa %s2390, 1
    %2392 = vsyncpa [#allocation5], 1
    %2393 = vsyncpa [#allocation8], 1

</llo_original>
